<compile_context>
chip_gen: v7x
topology: tpu7x:2x2x1
jax: 0.10.0
libtpu: 0.0.40
codegen_flags: <defaults>
</compile_context>

<pallas_src>
import math
import functools

import jax
import jax.numpy as jnp
from jax.experimental import pallas as pl
from jax.experimental.pallas import tpu as pltpu


def _layer_norm(x, gamma, beta, eps=1e-5):
    mu = jnp.mean(x, axis=-1, keepdims=True)
    var = jnp.mean((x - mu) ** 2, axis=-1, keepdims=True)
    return (x - mu) * jax.lax.rsqrt(var + eps) * gamma + beta


def encoder_layer_kernel(x_ref, mask_ref, wqkv_ref, wo_ref,
                         g1_ref, b1_ref, w1_ref, w2_ref, g2_ref, b2_ref,
                         out_ref, *attn_out, n_heads, d_k, d_v, bblk, seq):
    H, S = n_heads, seq
    R = bblk * S                       # rows handled in this grid step
    mm_dtype = wqkv_ref.dtype          # matmul operand dtype (f32 or bf16)

    x = x_ref[...]                     # (R, D), always f32 (residual / LN)

    # ---- fused QKV projection: one wide MXU matmul instead of three -------
    qkv = jnp.dot(x.astype(mm_dtype), wqkv_ref[...],
                  preferred_element_type=jnp.float32)
    q = qkv[:, : H * d_k] * jnp.float32(1.0 / math.sqrt(d_k))
    k = qkv[:, H * d_k: 2 * H * d_k]
    v = qkv[:, 2 * H * d_k:]

    # ---- regroup to head-batched layout (bblk*H, S, d), b-major / h-minor --
    # Per-head lane slices + one concat along a MAJOR axis: these relayouts
    # are guaranteed lowerable; see TODO(synk) in the header for the
    # single-transpose variant.
    def split_heads(t, d):
        parts = [t[:, h * d:(h + 1) * d].reshape(bblk, 1, S, d)
                 for h in range(H)]
        return jnp.concatenate(parts, axis=1).reshape(bblk * H, S, d)

    qh = split_heads(q, d_k).astype(mm_dtype)
    kh = split_heads(k, d_k).astype(mm_dtype)
    vh = split_heads(v, d_v).astype(mm_dtype)

    # ---- batched attention scores for all (batch, head) pairs at once -----
    scores = jnp.einsum("gqd,gkd->gqk", qh, kh,
                        preferred_element_type=jnp.float32)       # (G, S, S)
    scores = scores.reshape(bblk, H, S, S)

    # additive mask bias: built at the small (bblk,S,S) shape from the int8
    # mask stream, broadcast-added over heads (single VPU add, no select,
    # no full-shape f32 temp).
    bias = mask_ref[...].astype(jnp.float32) * jnp.float32(-1e9)  # (bblk,S,S)
    scores = scores + bias[:, None, :, :]

    # numerically-stable softmax; reciprocal goes to the (otherwise idle) EUP
    scores = scores - jnp.max(scores, axis=-1, keepdims=True)
    p = jnp.exp(scores)
    attn = p * pl.reciprocal(jnp.sum(p, axis=-1, keepdims=True), approx=True)

    # optional output: skip the store entirely when attn is not requested
    if attn_out:
        attn_out[0][...] = attn.astype(attn_out[0].dtype)

    # ---- context = attn @ V, batched over (batch, head) --------------------
    ctx = jnp.einsum("gqk,gkd->gqd",
                     attn.reshape(bblk * H, S, S).astype(mm_dtype), vh,
                     preferred_element_type=jnp.float32)          # (G, S, dv)
    ctx = ctx.reshape(bblk, H, S, d_v)
    ctx = jnp.concatenate([ctx[:, h].reshape(R, d_v) for h in range(H)],
                          axis=-1)                                # (R, H*dv)

    mha = jnp.dot(ctx.astype(mm_dtype), wo_ref[...],
                  preferred_element_type=jnp.float32)             # (R, D)

    # residual + LayerNorm, all in f32 (x was never downcast)
    y = _layer_norm(mha + x, g1_ref[...], b1_ref[...])

    # position-wise FFN on the flattened (R, D) rows
    h1 = jnp.maximum(jnp.dot(y.astype(mm_dtype), w1_ref[...],
                             preferred_element_type=jnp.float32), 0.0)
    ffn = jnp.dot(h1.astype(mm_dtype), w2_ref[...],
                  preferred_element_type=jnp.float32)
    z = _layer_norm(ffn + y, g2_ref[...], b2_ref[...])

    out_ref[...] = z.astype(out_ref.dtype)


def encoder_layer(x, attn_mask, params, *, n_heads, d_k, d_v,
                  bblk=None, compute_dtype=jnp.float32, out_dtype=None,
                  return_attn=True, vmem_limit_bytes=None):
    B, S, D = x.shape
    if bblk is None:
        # Keep the grid length >= 2 whenever possible: shards the "parallel"
        # axis across v7x's two TensorCores and lets BlockSpec double-buffering
        # overlap the next block's x/mask DMA with compute.
        bblk = max(1, B // 2)
        while B % bblk:
            bblk -= 1
    assert B % bblk == 0, "batch must be divisible by the batch block"
    d_ff = params["w1"].shape[1]
    H = n_heads
    cd = compute_dtype
    if out_dtype is None:
        out_dtype = x.dtype

    # Fused QKV weight -> one (D, H*(dk+dk+dv)) matmul instead of three.
    wqkv = jnp.concatenate([params["wq"], params["wk"], params["wv"]],
                           axis=1).astype(cd)
    wo = params["wo"].astype(cd)
    w1 = params["w1"].astype(cd)
    w2 = params["w2"].astype(cd)

    g1 = params["g1"].reshape(1, D).astype(jnp.float32)
    b1 = params["b1"].reshape(1, D).astype(jnp.float32)
    g2 = params["g2"].reshape(1, D).astype(jnp.float32)
    b2 = params["b2"].reshape(1, D).astype(jnp.float32)

    # Activations stay f32 into the kernel (residual / softmax / LN accuracy);
    # mask ships as int8 (4x less HBM->VMEM traffic than f32).
    x2d = x.reshape(B * S, D).astype(jnp.float32)
    mask_i8 = attn_mask.astype(jnp.int8)

    R = bblk * S
    qkv_w = H * (2 * d_k + d_v)

    # VMEM budget derived from actual block/temporary sizes (double-buffered
    # streams + resident weights), instead of a fixed 32 MiB.
    if vmem_limit_bytes is None:
        cb = jnp.dtype(cd).itemsize
        weight_bytes = cb * (D * qkv_w + H * d_v * D + D * d_ff + d_ff * D) \
            + 4 * 4 * D
        stream_bytes = 4 * R * D + bblk * S * S + 4 * R * D \
            + (4 * bblk * H * S * S if return_attn else 0)
        temp_bytes = 4 * (R * qkv_w + 3 * bblk * H * S * S + R * d_ff
                          + 6 * R * D)
        need = 2 * (weight_bytes + stream_bytes) + temp_bytes
        vmem_limit_bytes = int(min(max(2 * need, 16 * 2**20), 100 * 2**20))

    kernel = functools.partial(encoder_layer_kernel, n_heads=H, d_k=d_k,
                               d_v=d_v, bblk=bblk, seq=S)

    rep = lambda b: (0, 0)   # weights: same (whole) block every grid step

    if return_attn:
        out_shape = (jax.ShapeDtypeStruct((B * S, D), out_dtype),
                     jax.ShapeDtypeStruct((B, H, S, S), jnp.float32))
        out_specs = [pl.BlockSpec((R, D), lambda b: (b, 0)),
                     pl.BlockSpec((bblk, H, S, S), lambda b: (b, 0, 0, 0))]
    else:
        out_shape = jax.ShapeDtypeStruct((B * S, D), out_dtype)
        out_specs = pl.BlockSpec((R, D), lambda b: (b, 0))

    results = pl.pallas_call(
        kernel,
        out_shape=out_shape,
        grid_spec=pltpu.PrefetchScalarGridSpec(
            num_scalar_prefetch=0,
            grid=(B // bblk,),
            in_specs=[
                pl.BlockSpec((R, D), lambda b: (b, 0)),           # x rows
                pl.BlockSpec((bblk, S, S), lambda b: (b, 0, 0)),  # mask (int8)
                pl.BlockSpec((D, qkv_w), rep),                    # fused W_QKV
                pl.BlockSpec((H * d_v, D), rep),                  # fc (W_O)
                pl.BlockSpec((1, D), rep),                        # ln1 gamma
                pl.BlockSpec((1, D), rep),                        # ln1 beta
                pl.BlockSpec((D, d_ff), rep),                     # ffn W1
                pl.BlockSpec((d_ff, D), rep),                     # ffn W2
                pl.BlockSpec((1, D), rep),                        # ln2 gamma
                pl.BlockSpec((1, D), rep),                        # ln2 beta
            ],
            out_specs=out_specs,
        ),
        compiler_params=pltpu.CompilerParams(
            dimension_semantics=("parallel",),
            vmem_limit_bytes=vmem_limit_bytes),
    )(x2d, mask_i8, wqkv, wo, g1, b1, w1, w2, g2, b2)

    if return_attn:
        out2d, attn = results
        return out2d.reshape(B, S, D), attn
    return results.reshape(B, S, D), None


def reference_encoder_layer(x, attn_mask, p, *, n_heads, d_k, d_v):
    """Plain-JAX mirror of the PyTorch module for correctness checking."""
    B, S, D = x.shape
    q = (x @ p["wq"]).reshape(B, S, n_heads, d_k).transpose(0, 2, 1, 3)
    k = (x @ p["wk"]).reshape(B, S, n_heads, d_k).transpose(0, 2, 1, 3)
    v = (x @ p["wv"]).reshape(B, S, n_heads, d_v).transpose(0, 2, 1, 3)
    scores = jnp.einsum("bhqd,bhkd->bhqk", q, k) / math.sqrt(d_k)
    scores = jnp.where(attn_mask[:, None, :, :], -1e9, scores)
    attn = jax.nn.softmax(scores, axis=-1)
    ctx = jnp.einsum("bhqk,bhkd->bhqd", attn, v)
    ctx = ctx.transpose(0, 2, 1, 3).reshape(B, S, n_heads * d_v)
    mha = ctx @ p["wo"]

    def ln(a, g, b):
        mu = a.mean(-1, keepdims=True)
        var = ((a - mu) ** 2).mean(-1, keepdims=True)
        return (a - mu) / jnp.sqrt(var + 1e-5) * g + b

    y = ln(mha + x, p["g1"], p["b1"])
    h = jnp.maximum(y @ p["w1"], 0.0) @ p["w2"]
    z = ln(h + y, p["g2"], p["b2"])
    return z, attn


if __name__ == "__main__":
    B, S = 2, 8
    d_model, d_ff, d_k, d_v, n_heads = 32, 64, 8, 8, 4

    key = jax.random.PRNGKey(0)
    ks = jax.random.split(key, 8)

    x = jax.random.normal(ks[0], (B, S, d_model), dtype=jnp.float32)

    # Deterministic padding-style mask: mask last 2 key positions of batch 1.
    attn_mask = jnp.zeros((B, S, S), dtype=bool)
    attn_mask = attn_mask.at[1, :, S - 2:].set(True)

    params = {
        "wq": 0.1 * jax.random.normal(ks[1], (d_model, n_heads * d_k), jnp.float32),
        "wk": 0.1 * jax.random.normal(ks[2], (d_model, n_heads * d_k), jnp.float32),
        "wv": 0.1 * jax.random.normal(ks[3], (d_model, n_heads * d_v), jnp.float32),
        "wo": 0.1 * jax.random.normal(ks[4], (n_heads * d_v, d_model), jnp.float32),
        "w1": 0.1 * jax.random.normal(ks[5], (d_model, d_ff), jnp.float32),
        "w2": 0.1 * jax.random.normal(ks[6], (d_ff, d_model), jnp.float32),
        "g1": jnp.ones((d_model,), jnp.float32),
        "b1": jnp.zeros((d_model,), jnp.float32),
        "g2": jnp.ones((d_model,), jnp.float32),
        "b2": jnp.zeros((d_model,), jnp.float32),
    }

    ref_out, ref_attn = reference_encoder_layer(
        x, attn_mask, params, n_heads=n_heads, d_k=d_k, d_v=d_v)

    # --- f32 operands, default bblk (grid of 2 steps: megacore + pipelining) -
    run_f32 = jax.jit(functools.partial(
        encoder_layer, n_heads=n_heads, d_k=d_k, d_v=d_v,
        compute_dtype=jnp.float32))
    out, attn = run_f32(x, attn_mask, params)
    jax.block_until_ready((out, attn))

    assert out.shape == (B, S, d_model)
    assert attn.shape == (B, n_heads, S, S)
    # Tolerance slightly looser than exact math because the softmax denominator
    # uses the hardware approximate reciprocal (EUP).
    assert jnp.allclose(out, ref_out, atol=2e-3, rtol=2e-3)
    assert jnp.allclose(attn, ref_attn, atol=2e-3, rtol=2e-3)

    # --- attn output skipped entirely (no lane-sparse store) -----------------
    run_noattn = jax.jit(functools.partial(
        encoder_layer, n_heads=n_heads, d_k=d_k, d_v=d_v,
        compute_dtype=jnp.float32, return_attn=False))
    out_n, attn_n = run_noattn(x, attn_mask, params)
    jax.block_until_ready(out_n)
    assert attn_n is None
    assert jnp.allclose(out_n, ref_out, atol=2e-3, rtol=2e-3)

    # --- bf16 matmul operands; f32 residual / softmax / LayerNorm ------------
    run_bf16 = jax.jit(functools.partial(
        encoder_layer, n_heads=n_heads, d_k=d_k, d_v=d_v,
        bblk=1, compute_dtype=jnp.bfloat16))
    out_b, attn_b = run_bf16(x, attn_mask, params)
    jax.block_until_ready((out_b, attn_b))
    assert jnp.allclose(out_b, ref_out, atol=5e-2, rtol=5e-2)
    assert jnp.allclose(attn_b, ref_attn, atol=5e-2, rtol=5e-2)

    print("KERNEL_OK")
</pallas_src>

<mosaic_0001>
module attributes {stable_mosaic.version = 11 : i64} {
  func.func @encoder_layer_kernel(%arg0: i32, %arg1: memref<8x32xf32, #tpu.memory_space<vmem>>, %arg2: memref<1x8x8xi8, #tpu.memory_space<vmem>>, %arg3: memref<32x96xf32, #tpu.memory_space<vmem>>, %arg4: memref<32x32xf32, #tpu.memory_space<vmem>>, %arg5: memref<1x32xf32, #tpu.memory_space<vmem>>, %arg6: memref<1x32xf32, #tpu.memory_space<vmem>>, %arg7: memref<32x64xf32, #tpu.memory_space<vmem>>, %arg8: memref<64x32xf32, #tpu.memory_space<vmem>>, %arg9: memref<1x32xf32, #tpu.memory_space<vmem>>, %arg10: memref<1x32xf32, #tpu.memory_space<vmem>>, %arg11: memref<8x32xf32, #tpu.memory_space<vmem>>, %arg12: memref<1x4x8x8xf32, #tpu.memory_space<vmem>>) attributes {dimension_semantics = [#tpu.dimension_semantics<parallel>], iteration_bounds = array<i64: 2>, scalar_prefetch = 0 : i64, scratch_operands = 0 : i64, tpu.core_type = #tpu.core_type<tc>, window_params = [{transform_indices = @transform_0, window_bounds = array<i64: 8, 32>}, {transform_indices = @transform_1, window_bounds = array<i64: 1, 8, 8>}, {pipeline_mode = #tpu.pipeline_mode<synchronous>, transform_indices = @transform_2, window_bounds = array<i64: 32, 96>}, {pipeline_mode = #tpu.pipeline_mode<synchronous>, transform_indices = @transform_3, window_bounds = array<i64: 32, 32>}, {pipeline_mode = #tpu.pipeline_mode<synchronous>, transform_indices = @transform_4, window_bounds = array<i64: 1, 32>}, {pipeline_mode = #tpu.pipeline_mode<synchronous>, transform_indices = @transform_5, window_bounds = array<i64: 1, 32>}, {pipeline_mode = #tpu.pipeline_mode<synchronous>, transform_indices = @transform_6, window_bounds = array<i64: 32, 64>}, {pipeline_mode = #tpu.pipeline_mode<synchronous>, transform_indices = @transform_7, window_bounds = array<i64: 64, 32>}, {pipeline_mode = #tpu.pipeline_mode<synchronous>, transform_indices = @transform_8, window_bounds = array<i64: 1, 32>}, {pipeline_mode = #tpu.pipeline_mode<synchronous>, transform_indices = @transform_9, window_bounds = array<i64: 1, 32>}, {transform_indices = @transform_10, window_bounds = array<i64: 8, 32>}, {transform_indices = @transform_11, window_bounds = array<i64: 1, 4, 8, 8>}]} {
    %c0 = arith.constant 0 : index
    %c0_0 = arith.constant 0 : index
    %0 = vector.load %arg1[%c0, %c0_0] : memref<8x32xf32, #tpu.memory_space<vmem>>, vector<8x32xf32>
    %c0_1 = arith.constant 0 : index
    %c0_2 = arith.constant 0 : index
    %1 = vector.load %arg3[%c0_1, %c0_2] : memref<32x96xf32, #tpu.memory_space<vmem>>, vector<32x96xf32>
    %cst = arith.constant dense<0.000000e+00> : vector<8x96xf32>
    %2 = tpu.matmul %0, %1, %cst {dimension_numbers = #tpu.dot_dimension_numbers<[1], [0], [0], [1], [0, 0, 1, 1], [], []>} : vector<8x32xf32>, vector<32x96xf32>, vector<8x96xf32> -> vector<8x96xf32>
    %3 = vector.extract_strided_slice %2 {offsets = [0, 0], sizes = [8, 32], strides = [1, 1]} : vector<8x96xf32> to vector<8x32xf32>
    %cst_3 = arith.constant 0.353553385 : f32
    %4 = vector.broadcast %cst_3 : f32 to vector<8x32xf32>
    %5 = arith.mulf %3, %4 : vector<8x32xf32>
    %6 = vector.extract_strided_slice %2 {offsets = [0, 32], sizes = [8, 32], strides = [1, 1]} : vector<8x96xf32> to vector<8x32xf32>
    %7 = vector.extract_strided_slice %2 {offsets = [0, 64], sizes = [8, 32], strides = [1, 1]} : vector<8x96xf32> to vector<8x32xf32>
    %8 = vector.extract_strided_slice %5 {offsets = [0, 0], sizes = [8, 8], strides = [1, 1]} : vector<8x32xf32> to vector<8x8xf32>
    %9 = vector.shape_cast %8 : vector<8x8xf32> to vector<1x1x8x8xf32>
    %10 = vector.extract_strided_slice %5 {offsets = [0, 8], sizes = [8, 8], strides = [1, 1]} : vector<8x32xf32> to vector<8x8xf32>
    %11 = vector.shape_cast %10 : vector<8x8xf32> to vector<1x1x8x8xf32>
    %12 = vector.extract_strided_slice %5 {offsets = [0, 16], sizes = [8, 8], strides = [1, 1]} : vector<8x32xf32> to vector<8x8xf32>
    %13 = vector.shape_cast %12 : vector<8x8xf32> to vector<1x1x8x8xf32>
    %14 = vector.extract_strided_slice %5 {offsets = [0, 24], sizes = [8, 8], strides = [1, 1]} : vector<8x32xf32> to vector<8x8xf32>
    %15 = vector.shape_cast %14 : vector<8x8xf32> to vector<1x1x8x8xf32>
    %16 = tpu.concatenate %9, %11, %13, %15 in 1 : vector<1x1x8x8xf32>, vector<1x1x8x8xf32>, vector<1x1x8x8xf32>, vector<1x1x8x8xf32> -> vector<1x4x8x8xf32>
    %17 = vector.shape_cast %16 : vector<1x4x8x8xf32> to vector<4x8x8xf32>
    %18 = vector.extract_strided_slice %6 {offsets = [0, 0], sizes = [8, 8], strides = [1, 1]} : vector<8x32xf32> to vector<8x8xf32>
    %19 = vector.shape_cast %18 : vector<8x8xf32> to vector<1x1x8x8xf32>
    %20 = vector.extract_strided_slice %6 {offsets = [0, 8], sizes = [8, 8], strides = [1, 1]} : vector<8x32xf32> to vector<8x8xf32>
    %21 = vector.shape_cast %20 : vector<8x8xf32> to vector<1x1x8x8xf32>
    %22 = vector.extract_strided_slice %6 {offsets = [0, 16], sizes = [8, 8], strides = [1, 1]} : vector<8x32xf32> to vector<8x8xf32>
    %23 = vector.shape_cast %22 : vector<8x8xf32> to vector<1x1x8x8xf32>
    %24 = vector.extract_strided_slice %6 {offsets = [0, 24], sizes = [8, 8], strides = [1, 1]} : vector<8x32xf32> to vector<8x8xf32>
    %25 = vector.shape_cast %24 : vector<8x8xf32> to vector<1x1x8x8xf32>
    %26 = tpu.concatenate %19, %21, %23, %25 in 1 : vector<1x1x8x8xf32>, vector<1x1x8x8xf32>, vector<1x1x8x8xf32>, vector<1x1x8x8xf32> -> vector<1x4x8x8xf32>
    %27 = vector.shape_cast %26 : vector<1x4x8x8xf32> to vector<4x8x8xf32>
    %28 = vector.extract_strided_slice %7 {offsets = [0, 0], sizes = [8, 8], strides = [1, 1]} : vector<8x32xf32> to vector<8x8xf32>
    %29 = vector.shape_cast %28 : vector<8x8xf32> to vector<1x1x8x8xf32>
    %30 = vector.extract_strided_slice %7 {offsets = [0, 8], sizes = [8, 8], strides = [1, 1]} : vector<8x32xf32> to vector<8x8xf32>
    %31 = vector.shape_cast %30 : vector<8x8xf32> to vector<1x1x8x8xf32>
    %32 = vector.extract_strided_slice %7 {offsets = [0, 16], sizes = [8, 8], strides = [1, 1]} : vector<8x32xf32> to vector<8x8xf32>
    %33 = vector.shape_cast %32 : vector<8x8xf32> to vector<1x1x8x8xf32>
    %34 = vector.extract_strided_slice %7 {offsets = [0, 24], sizes = [8, 8], strides = [1, 1]} : vector<8x32xf32> to vector<8x8xf32>
    %35 = vector.shape_cast %34 : vector<8x8xf32> to vector<1x1x8x8xf32>
    %36 = tpu.concatenate %29, %31, %33, %35 in 1 : vector<1x1x8x8xf32>, vector<1x1x8x8xf32>, vector<1x1x8x8xf32>, vector<1x1x8x8xf32> -> vector<1x4x8x8xf32>
    %37 = vector.shape_cast %36 : vector<1x4x8x8xf32> to vector<4x8x8xf32>
    "tpu.trace_start"() <{level = 10 : i32, message = "gqd,gkd->gqk"}> : () -> ()
    %cst_4 = arith.constant dense<0.000000e+00> : vector<4x8x8xf32>
    %38 = tpu.matmul %17, %27, %cst_4 {dimension_numbers = #tpu.dot_dimension_numbers<[2], [2], [1], [1], [0, 0, 0, 1, 1, 1], [0], [0]>} : vector<4x8x8xf32>, vector<4x8x8xf32>, vector<4x8x8xf32> -> vector<4x8x8xf32>
    "tpu.trace_stop"() : () -> ()
    %39 = vector.shape_cast %38 : vector<4x8x8xf32> to vector<1x4x8x8xf32>
    %c0_5 = arith.constant 0 : index
    %c0_6 = arith.constant 0 : index
    %c0_7 = arith.constant 0 : index
    %40 = vector.load %arg2[%c0_5, %c0_6, %c0_7] : memref<1x8x8xi8, #tpu.memory_space<vmem>>, vector<1x8x8xi8>
    %41 = arith.sitofp %40 : vector<1x8x8xi8> to vector<1x8x8xf32>
    %cst_8 = arith.constant -1.000000e+09 : f32
    %42 = vector.broadcast %cst_8 : f32 to vector<1x8x8xf32>
    %43 = arith.mulf %41, %42 : vector<1x8x8xf32>
    %44 = vector.shape_cast %43 : vector<1x8x8xf32> to vector<1x1x8x8xf32>
    %45 = vector.broadcast %44 : vector<1x1x8x8xf32> to vector<1x4x8x8xf32>
    %46 = arith.addf %39, %45 : vector<1x4x8x8xf32>
    %cst_9 = arith.constant dense<0xFF800000> : vector<1x4x8xf32>
    %47 = vector.multi_reduction <maximumf>, %46, %cst_9 [3] : vector<1x4x8x8xf32> to vector<1x4x8xf32>
    %48 = vector.shape_cast %47 : vector<1x4x8xf32> to vector<1x4x8x1xf32>
    %49 = vector.broadcast %48 : vector<1x4x8x1xf32> to vector<1x4x8x8xf32>
    %50 = arith.subf %46, %49 : vector<1x4x8x8xf32>
    %51 = math.exp %50 : vector<1x4x8x8xf32>
    %cst_10 = arith.constant dense<0.000000e+00> : vector<1x4x8xf32>
    %52 = vector.multi_reduction <add>, %51, %cst_10 [3] : vector<1x4x8x8xf32> to vector<1x4x8xf32>
    %53 = vector.shape_cast %52 : vector<1x4x8xf32> to vector<1x4x8x1xf32>
    %54 = tpu.reciprocal %53 {approx = true} : vector<1x4x8x1xf32> -> vector<1x4x8x1xf32>
    %55 = vector.broadcast %54 : vector<1x4x8x1xf32> to vector<1x4x8x8xf32>
    %56 = arith.mulf %51, %55 : vector<1x4x8x8xf32>
    %c0_11 = arith.constant 0 : index
    %c0_12 = arith.constant 0 : index
    %c0_13 = arith.constant 0 : index
    %c0_14 = arith.constant 0 : index
    %57 = vector.load %arg12[%c0_11, %c0_12, %c0_13, %c0_14] : memref<1x4x8x8xf32, #tpu.memory_space<vmem>>, vector<1x4x8x8xf32>
    tpu.vector_store %arg12[%c0_11, %c0_12, %c0_13, %c0_14], %56 {strides = array<i32>} : memref<1x4x8x8xf32, #tpu.memory_space<vmem>>, vector<1x4x8x8xf32>,
    %58 = vector.shape_cast %56 : vector<1x4x8x8xf32> to vector<4x8x8xf32>
    "tpu.trace_start"() <{level = 10 : i32, message = "gqk,gkd->gqd"}> : () -> ()
    %cst_15 = arith.constant dense<0.000000e+00> : vector<4x8x8xf32>
    %59 = tpu.matmul %58, %37, %cst_15 {dimension_numbers = #tpu.dot_dimension_numbers<[2], [1], [1], [2], [0, 0, 0, 1, 1, 2], [0], [0]>} : vector<4x8x8xf32>, vector<4x8x8xf32>, vector<4x8x8xf32> -> vector<4x8x8xf32>
    "tpu.trace_stop"() : () -> ()
    %60 = vector.shape_cast %59 : vector<4x8x8xf32> to vector<1x4x8x8xf32>
    %61 = vector.extract_strided_slice %60 {offsets = [0, 0, 0, 0], sizes = [1, 1, 8, 8], strides = [1, 1, 1, 1]} : vector<1x4x8x8xf32> to vector<1x1x8x8xf32>
    %62 = vector.shape_cast %61 : vector<1x1x8x8xf32> to vector<1x8x8xf32>
    %63 = vector.shape_cast %62 : vector<1x8x8xf32> to vector<8x8xf32>
    %64 = vector.extract_strided_slice %60 {offsets = [0, 1, 0, 0], sizes = [1, 1, 8, 8], strides = [1, 1, 1, 1]} : vector<1x4x8x8xf32> to vector<1x1x8x8xf32>
    %65 = vector.shape_cast %64 : vector<1x1x8x8xf32> to vector<1x8x8xf32>
    %66 = vector.shape_cast %65 : vector<1x8x8xf32> to vector<8x8xf32>
    %67 = vector.extract_strided_slice %60 {offsets = [0, 2, 0, 0], sizes = [1, 1, 8, 8], strides = [1, 1, 1, 1]} : vector<1x4x8x8xf32> to vector<1x1x8x8xf32>
    %68 = vector.shape_cast %67 : vector<1x1x8x8xf32> to vector<1x8x8xf32>
    %69 = vector.shape_cast %68 : vector<1x8x8xf32> to vector<8x8xf32>
    %70 = vector.extract_strided_slice %60 {offsets = [0, 3, 0, 0], sizes = [1, 1, 8, 8], strides = [1, 1, 1, 1]} : vector<1x4x8x8xf32> to vector<1x1x8x8xf32>
    %71 = vector.shape_cast %70 : vector<1x1x8x8xf32> to vector<1x8x8xf32>
    %72 = vector.shape_cast %71 : vector<1x8x8xf32> to vector<8x8xf32>
    %73 = tpu.concatenate %63, %66, %69, %72 in 1 : vector<8x8xf32>, vector<8x8xf32>, vector<8x8xf32>, vector<8x8xf32> -> vector<8x32xf32>
    %c0_16 = arith.constant 0 : index
    %c0_17 = arith.constant 0 : index
    %74 = vector.load %arg4[%c0_16, %c0_17] : memref<32x32xf32, #tpu.memory_space<vmem>>, vector<32x32xf32>
    %cst_18 = arith.constant dense<0.000000e+00> : vector<8x32xf32>
    %75 = tpu.matmul %73, %74, %cst_18 {dimension_numbers = #tpu.dot_dimension_numbers<[1], [0], [0], [1], [0, 0, 1, 1], [], []>} : vector<8x32xf32>, vector<32x32xf32>, vector<8x32xf32> -> vector<8x32xf32>
    %76 = arith.addf %75, %0 : vector<8x32xf32>
    %c0_19 = arith.constant 0 : index
    %c0_20 = arith.constant 0 : index
    %77 = vector.load %arg5[%c0_19, %c0_20] : memref<1x32xf32, #tpu.memory_space<vmem>>, vector<1x32xf32>
    %c0_21 = arith.constant 0 : index
    %c0_22 = arith.constant 0 : index
    %78 = vector.load %arg6[%c0_21, %c0_22] : memref<1x32xf32, #tpu.memory_space<vmem>>, vector<1x32xf32>
    %cst_23 = arith.constant dense<0.000000e+00> : vector<8xf32>
    %79 = vector.multi_reduction <add>, %76, %cst_23 [1] : vector<8x32xf32> to vector<8xf32>
    %80 = vector.shape_cast %79 : vector<8xf32> to vector<8x1xf32>
    %cst_24 = arith.constant 3.200000e+01 : f32
    %81 = vector.broadcast %cst_24 : f32 to vector<8x1xf32>
    %82 = arith.divf %80, %81 : vector<8x1xf32>
    %83 = vector.broadcast %82 : vector<8x1xf32> to vector<8x32xf32>
    %84 = arith.subf %76, %83 : vector<8x32xf32>
    %85 = arith.mulf %84, %84 : vector<8x32xf32>
    %cst_25 = arith.constant dense<0.000000e+00> : vector<8xf32>
    %86 = vector.multi_reduction <add>, %85, %cst_25 [1] : vector<8x32xf32> to vector<8xf32>
    %87 = vector.shape_cast %86 : vector<8xf32> to vector<8x1xf32>
    %cst_26 = arith.constant 3.200000e+01 : f32
    %88 = vector.broadcast %cst_26 : f32 to vector<8x1xf32>
    %89 = arith.divf %87, %88 : vector<8x1xf32>
    %90 = vector.broadcast %82 : vector<8x1xf32> to vector<8x32xf32>
    %91 = arith.subf %76, %90 : vector<8x32xf32>
    %cst_27 = arith.constant 9.99999974E-6 : f32
    %92 = vector.broadcast %cst_27 : f32 to vector<8x1xf32>
    %93 = arith.addf %89, %92 : vector<8x1xf32>
    %94 = math.rsqrt %93 : vector<8x1xf32>
    %95 = vector.broadcast %94 : vector<8x1xf32> to vector<8x32xf32>
    %96 = arith.mulf %91, %95 : vector<8x32xf32>
    %97 = vector.broadcast %77 : vector<1x32xf32> to vector<8x32xf32>
    %98 = arith.mulf %96, %97 : vector<8x32xf32>
    %99 = vector.broadcast %78 : vector<1x32xf32> to vector<8x32xf32>
    %100 = arith.addf %98, %99 : vector<8x32xf32>
    %c0_28 = arith.constant 0 : index
    %c0_29 = arith.constant 0 : index
    %101 = vector.load %arg7[%c0_28, %c0_29] : memref<32x64xf32, #tpu.memory_space<vmem>>, vector<32x64xf32>
    %cst_30 = arith.constant dense<0.000000e+00> : vector<8x64xf32>
    %102 = tpu.matmul %100, %101, %cst_30 {dimension_numbers = #tpu.dot_dimension_numbers<[1], [0], [0], [1], [0, 0, 1, 1], [], []>} : vector<8x32xf32>, vector<32x64xf32>, vector<8x64xf32> -> vector<8x64xf32>
    %cst_31 = arith.constant 0.000000e+00 : f32
    %103 = vector.broadcast %cst_31 : f32 to vector<8x64xf32>
    %104 = arith.maximumf %102, %103 : vector<8x64xf32>
    %c0_32 = arith.constant 0 : index
    %c0_33 = arith.constant 0 : index
    %105 = vector.load %arg8[%c0_32, %c0_33] : memref<64x32xf32, #tpu.memory_space<vmem>>, vector<64x32xf32>
    %cst_34 = arith.constant dense<0.000000e+00> : vector<8x32xf32>
    %106 = tpu.matmul %104, %105, %cst_34 {dimension_numbers = #tpu.dot_dimension_numbers<[1], [0], [0], [1], [0, 0, 1, 1], [], []>} : vector<8x64xf32>, vector<64x32xf32>, vector<8x32xf32> -> vector<8x32xf32>
    %107 = arith.addf %106, %100 : vector<8x32xf32>
    %c0_35 = arith.constant 0 : index
    %c0_36 = arith.constant 0 : index
    %108 = vector.load %arg9[%c0_35, %c0_36] : memref<1x32xf32, #tpu.memory_space<vmem>>, vector<1x32xf32>
    %c0_37 = arith.constant 0 : index
    %c0_38 = arith.constant 0 : index
    %109 = vector.load %arg10[%c0_37, %c0_38] : memref<1x32xf32, #tpu.memory_space<vmem>>, vector<1x32xf32>
    %cst_39 = arith.constant dense<0.000000e+00> : vector<8xf32>
    %110 = vector.multi_reduction <add>, %107, %cst_39 [1] : vector<8x32xf32> to vector<8xf32>
    %111 = vector.shape_cast %110 : vector<8xf32> to vector<8x1xf32>
    %cst_40 = arith.constant 3.200000e+01 : f32
    %112 = vector.broadcast %cst_40 : f32 to vector<8x1xf32>
    %113 = arith.divf %111, %112 : vector<8x1xf32>
    %114 = vector.broadcast %113 : vector<8x1xf32> to vector<8x32xf32>
    %115 = arith.subf %107, %114 : vector<8x32xf32>
    %116 = arith.mulf %115, %115 : vector<8x32xf32>
    %cst_41 = arith.constant dense<0.000000e+00> : vector<8xf32>
    %117 = vector.multi_reduction <add>, %116, %cst_41 [1] : vector<8x32xf32> to vector<8xf32>
    %118 = vector.shape_cast %117 : vector<8xf32> to vector<8x1xf32>
    %cst_42 = arith.constant 3.200000e+01 : f32
    %119 = vector.broadcast %cst_42 : f32 to vector<8x1xf32>
    %120 = arith.divf %118, %119 : vector<8x1xf32>
    %121 = vector.broadcast %113 : vector<8x1xf32> to vector<8x32xf32>
    %122 = arith.subf %107, %121 : vector<8x32xf32>
    %cst_43 = arith.constant 9.99999974E-6 : f32
    %123 = vector.broadcast %cst_43 : f32 to vector<8x1xf32>
    %124 = arith.addf %120, %123 : vector<8x1xf32>
    %125 = math.rsqrt %124 : vector<8x1xf32>
    %126 = vector.broadcast %125 : vector<8x1xf32> to vector<8x32xf32>
    %127 = arith.mulf %122, %126 : vector<8x32xf32>
    %128 = vector.broadcast %108 : vector<1x32xf32> to vector<8x32xf32>
    %129 = arith.mulf %127, %128 : vector<8x32xf32>
    %130 = vector.broadcast %109 : vector<1x32xf32> to vector<8x32xf32>
    %131 = arith.addf %129, %130 : vector<8x32xf32>
    %c0_44 = arith.constant 0 : index
    %c0_45 = arith.constant 0 : index
    %132 = vector.load %arg11[%c0_44, %c0_45] : memref<8x32xf32, #tpu.memory_space<vmem>>, vector<8x32xf32>
    tpu.vector_store %arg11[%c0_44, %c0_45], %131 {strides = array<i32>} : memref<8x32xf32, #tpu.memory_space<vmem>>, vector<8x32xf32>,
    return
  }
  func.func @transform_0(%arg0: i32) -> (i32, i32) {
    %c0_i32 = arith.constant 0 : i32
    %c0_i32_0 = arith.constant 0 : i32
    return %arg0, %c0_i32 : i32, i32
  }
  func.func @transform_1(%arg0: i32) -> (i32, i32, i32) {
    %c0_i32 = arith.constant 0 : i32
    %c0_i32_0 = arith.constant 0 : i32
    %c0_i32_1 = arith.constant 0 : i32
    return %arg0, %c0_i32, %c0_i32_0 : i32, i32, i32
  }
  func.func @transform_2(%arg0: i32) -> (i32, i32) {
    %c0_i32 = arith.constant 0 : i32
    %c0_i32_0 = arith.constant 0 : i32
    %c0_i32_1 = arith.constant 0 : i32
    return %c0_i32, %c0_i32_0 : i32, i32
  }
  func.func @transform_3(%arg0: i32) -> (i32, i32) {
    %c0_i32 = arith.constant 0 : i32
    %c0_i32_0 = arith.constant 0 : i32
    %c0_i32_1 = arith.constant 0 : i32
    return %c0_i32, %c0_i32_0 : i32, i32
  }
  func.func @transform_4(%arg0: i32) -> (i32, i32) {
    %c0_i32 = arith.constant 0 : i32
    %c0_i32_0 = arith.constant 0 : i32
    %c0_i32_1 = arith.constant 0 : i32
    return %c0_i32, %c0_i32_0 : i32, i32
  }
  func.func @transform_5(%arg0: i32) -> (i32, i32) {
    %c0_i32 = arith.constant 0 : i32
    %c0_i32_0 = arith.constant 0 : i32
    %c0_i32_1 = arith.constant 0 : i32
    return %c0_i32, %c0_i32_0 : i32, i32
  }
  func.func @transform_6(%arg0: i32) -> (i32, i32) {
    %c0_i32 = arith.constant 0 : i32
    %c0_i32_0 = arith.constant 0 : i32
    %c0_i32_1 = arith.constant 0 : i32
    return %c0_i32, %c0_i32_0 : i32, i32
  }
  func.func @transform_7(%arg0: i32) -> (i32, i32) {
    %c0_i32 = arith.constant 0 : i32
    %c0_i32_0 = arith.constant 0 : i32
    %c0_i32_1 = arith.constant 0 : i32
    return %c0_i32, %c0_i32_0 : i32, i32
  }
  func.func @transform_8(%arg0: i32) -> (i32, i32) {
    %c0_i32 = arith.constant 0 : i32
    %c0_i32_0 = arith.constant 0 : i32
    %c0_i32_1 = arith.constant 0 : i32
    return %c0_i32, %c0_i32_0 : i32, i32
  }
  func.func @transform_9(%arg0: i32) -> (i32, i32) {
    %c0_i32 = arith.constant 0 : i32
    %c0_i32_0 = arith.constant 0 : i32
    %c0_i32_1 = arith.constant 0 : i32
    return %c0_i32, %c0_i32_0 : i32, i32
  }
  func.func @transform_10(%arg0: i32) -> (i32, i32) {
    %c0_i32 = arith.constant 0 : i32
    %c0_i32_0 = arith.constant 0 : i32
    return %arg0, %c0_i32 : i32, i32
  }
  func.func @transform_11(%arg0: i32) -> (i32, i32, i32, i32) {
    %c0_i32 = arith.constant 0 : i32
    %c0_i32_0 = arith.constant 0 : i32
    %c0_i32_1 = arith.constant 0 : i32
    %c0_i32_2 = arith.constant 0 : i32
    return %arg0, %c0_i32, %c0_i32_0, %c0_i32_1 : i32, i32, i32, i32
  }
}

</mosaic_0001>

<llo_original>
// kernel: encoder_layer.1
$region0: #{encoder_layer.1}
  #allocation0 [shape = 'u32[]', space=smem, size = 0x4, offset = 0x4, fixed_abs, tag = 'smem constant byte address 0x4 - core index']
  #allocation1 [shape = 'u32[144,128]{1,0:T(1,128)}', space=vmem, size = 0x12000, scoped, tag = 'internal scratch']
  %s0 = inlined_call_operand.vmem [shape: f32[16,32], index: 0, kind: input, shape index: {}]
  %s1 = inlined_call_operand.vmem [shape: s8[2,8,8], index: 1, kind: input, shape index: {}]
  %s2 = inlined_call_operand.vmem [shape: f32[32,96], index: 2, kind: input, shape index: {}]
  %s3 = inlined_call_operand.vmem [shape: f32[32,32], index: 3, kind: input, shape index: {}]
  %s4 = inlined_call_operand.vmem [shape: f32[1,32], index: 4, kind: input, shape index: {}]
  %s5 = inlined_call_operand.vmem [shape: f32[1,32], index: 5, kind: input, shape index: {}]
  %s6 = inlined_call_operand.vmem [shape: f32[32,64], index: 6, kind: input, shape index: {}]
  %s7 = inlined_call_operand.vmem [shape: f32[64,32], index: 7, kind: input, shape index: {}]
  %s8 = inlined_call_operand.vmem [shape: f32[1,32], index: 8, kind: input, shape index: {}]
  %s9 = inlined_call_operand.vmem [shape: f32[1,32], index: 9, kind: input, shape index: {}]
  %s10 = inlined_call_operand.hbm [shape: f32[16,32], index: 10, kind: output, shape index: {0}]
  %s11 = inlined_call_operand.hbm [shape: f32[2,4,8,8], index: 11, kind: output, shape index: {1}]
  %12 = xla_tuple %s10, %s11
  %s13 = sld [smem:[#allocation0]]
  $region81: #{encoder_layer.1} parent=0
    _
  %s15 = ssub.s32 1, %s13
  %s16 = scalar_select 0, %s15, %s13
  $region1: #{encoder_layer.1} parent=0
    #allocation2 [shape = 'u8[8192]{0}', space=vmem, size = 0x2000, scoped, tag = 'output window, operand 0']
    #allocation3 [shape = 's32[2]{0}', space=sflag, size = 0x8, scoped, tag = 'scoped memory for encoder_layer.1']
    #allocation4 [shape = 'u8[32768]{0}', space=vmem, size = 0x8000, scoped, tag = 'output window, operand 1']
    #allocation5 [shape = 's32[2]{0}', space=sflag, size = 0x8, scoped, tag = 'scoped memory for encoder_layer.1']
    %17 = vsyncpa [#allocation3], 0
    %s18 = scalar_lea.sflag [#allocation3], 1
    %19 = vsyncpa %s18, 0
    %20 = vsyncpa [#allocation5], 0
    %s21 = scalar_lea.sflag [#allocation5], 1
    %22 = vsyncpa %s21, 0
    loop: start=0, step=1, limit=4
    $region2: #{encoder_layer.1} parent=1 // loop_pre_header
      _
    $region3: #{encoder_layer.1} parent=1 // loop_header
      %s24 = sphi 0, %s28
      %p25 = scmp.ge.s32.totalorder %s24, 4
      %s34 = sphi 0, %s36
      %s37 = sphi 0, %s34
      %s38 = sphi 0, %s37
      %s54 = sphi 0, %s38
      %s60 = sphi 0, %s62
      %s63 = sphi 0, %s60
      %s64 = sphi 0, %s63
      %s80 = sphi 0, %s64
      %s84 = sphi 0, %s84
      %s86 = sphi 0, %s84
      %s87 = sphi 0, %s86
      %s101 = sphi 0, %s87
      %s105 = sphi 0, %s105
      %s107 = sphi 0, %s105
      %s108 = sphi 0, %s107
      %s122 = sphi 0, %s108
      %s126 = sphi 0, %s126
      %s128 = sphi 0, %s126
      %s129 = sphi 0, %s128
      %s143 = sphi 0, %s129
      %s147 = sphi 0, %s147
      %s149 = sphi 0, %s147
      %s150 = sphi 0, %s149
      %s164 = sphi 0, %s150
      %s168 = sphi 0, %s168
      %s170 = sphi 0, %s168
      %s171 = sphi 0, %s170
      %s185 = sphi 0, %s171
      %s189 = sphi 0, %s189
      %s191 = sphi 0, %s189
      %s192 = sphi 0, %s191
      %s206 = sphi 0, %s192
      %s210 = sphi 0, %s210
      %s212 = sphi 0, %s210
      %s213 = sphi 0, %s212
      %s227 = sphi 0, %s213
      %s231 = sphi 0, %s231
      %s233 = sphi 0, %s231
      %s234 = sphi 0, %s233
      %s248 = sphi 0, %s234
      %s254 = sphi 0, %s256
      %s257 = sphi 0, %s254
      %s258 = sphi 0, %s257
      %s274 = sphi 0, %s258
      %s280 = sphi 0, %s282
      %s283 = sphi 0, %s280
      %s284 = sphi 0, %s283
      %s300 = sphi 0, %s284
    $region4: #{encoder_layer.1} parent=1 // loop_header_branch
      %27 = sbr.rel (%p25) target = $region8
    $region5: #{encoder_layer.1} parent=1 // loop_body
      %s29 = ssub.s32 %s24, 1
      %s30 = ssub.s32 %s24, 2
      %s31 = sadd.s32 %s24, 1
      %s32 = ssub.s32 %s24, %s31
      %p33 = scmp.eq.s32.totalorder %s32, 0
      %s35 = sadd.s32 %s34, 1
      %s36 = scalar_select %p33, %s34, %s35
      %p39 = pneg %p33
      %p40 = scmp.eq.s32.totalorder %s24, 1
      %p41 = por %p39, %p40
      %p42 = scmp.ne.s32.totalorder %s34, %s37
      %p43 = scmp.eq.s32.totalorder %s24, 0
      %p44 = por %p42, %p43
      %p45 = scmp.ne.s32.totalorder %s34, %s37
      %p46 = scmp.eq.s32.totalorder %s29, 1
      %p47 = por %p45, %p46
      %p48 = scmp.ne.s32.totalorder %s37, %s38
      %p49 = scmp.eq.s32.totalorder %s29, 0
      %p50 = por %p48, %p49
      %p51 = scmp.ne.s32.totalorder %s37, %s38
      %p52 = scmp.eq.s32.totalorder %s30, 1
      %p53 = por %p51, %p52
      %p55 = scmp.ne.s32.totalorder %s38, %s54
      %p56 = scmp.eq.s32.totalorder %s30, 0
      %p57 = por %p55, %p56
      %s58 = ssub.s32 %s24, %s31
      %p59 = scmp.eq.s32.totalorder %s58, 0
      %s61 = sadd.s32 %s60, 1
      %s62 = scalar_select %p59, %s60, %s61
      %p65 = pneg %p59
      %p66 = scmp.eq.s32.totalorder %s24, 1
      %p67 = por %p65, %p66
      %p68 = scmp.ne.s32.totalorder %s60, %s63
      %p69 = scmp.eq.s32.totalorder %s24, 0
      %p70 = por %p68, %p69
      %p71 = scmp.ne.s32.totalorder %s60, %s63
      %p72 = scmp.eq.s32.totalorder %s29, 1
      %p73 = por %p71, %p72
      %p74 = scmp.ne.s32.totalorder %s63, %s64
      %p75 = scmp.eq.s32.totalorder %s29, 0
      %p76 = por %p74, %p75
      %p77 = scmp.ne.s32.totalorder %s63, %s64
      %p78 = scmp.eq.s32.totalorder %s30, 1
      %p79 = por %p77, %p78
      %p81 = scmp.ne.s32.totalorder %s64, %s80
      %p82 = scmp.eq.s32.totalorder %s30, 0
      %p83 = por %p81, %p82
      %s85 = sadd.s32 %s84, 1
      %p88 = scmp.eq.s32.totalorder %s24, 1
      %p89 = scmp.ne.s32.totalorder %s84, %s86
      %p90 = scmp.eq.s32.totalorder %s24, 0
      %p91 = por %p89, %p90
      %p92 = scmp.ne.s32.totalorder %s84, %s86
      %p93 = scmp.eq.s32.totalorder %s29, 1
      %p94 = por %p92, %p93
      %p95 = scmp.ne.s32.totalorder %s86, %s87
      %p96 = scmp.eq.s32.totalorder %s29, 0
      %p97 = por %p95, %p96
      %p98 = scmp.ne.s32.totalorder %s86, %s87
      %p99 = scmp.eq.s32.totalorder %s30, 1
      %p100 = por %p98, %p99
      %p102 = scmp.ne.s32.totalorder %s87, %s101
      %p103 = scmp.eq.s32.totalorder %s30, 0
      %p104 = por %p102, %p103
      %s106 = sadd.s32 %s105, 1
      %p109 = scmp.eq.s32.totalorder %s24, 1
      %p110 = scmp.ne.s32.totalorder %s105, %s107
      %p111 = scmp.eq.s32.totalorder %s24, 0
      %p112 = por %p110, %p111
      %p113 = scmp.ne.s32.totalorder %s105, %s107
      %p114 = scmp.eq.s32.totalorder %s29, 1
      %p115 = por %p113, %p114
      %p116 = scmp.ne.s32.totalorder %s107, %s108
      %p117 = scmp.eq.s32.totalorder %s29, 0
      %p118 = por %p116, %p117
      %p119 = scmp.ne.s32.totalorder %s107, %s108
      %p120 = scmp.eq.s32.totalorder %s30, 1
      %p121 = por %p119, %p120
      %p123 = scmp.ne.s32.totalorder %s108, %s122
      %p124 = scmp.eq.s32.totalorder %s30, 0
      %p125 = por %p123, %p124
      %s127 = sadd.s32 %s126, 1
      %p130 = scmp.eq.s32.totalorder %s24, 1
      %p131 = scmp.ne.s32.totalorder %s126, %s128
      %p132 = scmp.eq.s32.totalorder %s24, 0
      %p133 = por %p131, %p132
      %p134 = scmp.ne.s32.totalorder %s126, %s128
      %p135 = scmp.eq.s32.totalorder %s29, 1
      %p136 = por %p134, %p135
      %p137 = scmp.ne.s32.totalorder %s128, %s129
      %p138 = scmp.eq.s32.totalorder %s29, 0
      %p139 = por %p137, %p138
      %p140 = scmp.ne.s32.totalorder %s128, %s129
      %p141 = scmp.eq.s32.totalorder %s30, 1
      %p142 = por %p140, %p141
      %p144 = scmp.ne.s32.totalorder %s129, %s143
      %p145 = scmp.eq.s32.totalorder %s30, 0
      %p146 = por %p144, %p145
      %s148 = sadd.s32 %s147, 1
      %p151 = scmp.eq.s32.totalorder %s24, 1
      %p152 = scmp.ne.s32.totalorder %s147, %s149
      %p153 = scmp.eq.s32.totalorder %s24, 0
      %p154 = por %p152, %p153
      %p155 = scmp.ne.s32.totalorder %s147, %s149
      %p156 = scmp.eq.s32.totalorder %s29, 1
      %p157 = por %p155, %p156
      %p158 = scmp.ne.s32.totalorder %s149, %s150
      %p159 = scmp.eq.s32.totalorder %s29, 0
      %p160 = por %p158, %p159
      %p161 = scmp.ne.s32.totalorder %s149, %s150
      %p162 = scmp.eq.s32.totalorder %s30, 1
      %p163 = por %p161, %p162
      %p165 = scmp.ne.s32.totalorder %s150, %s164
      %p166 = scmp.eq.s32.totalorder %s30, 0
      %p167 = por %p165, %p166
      %s169 = sadd.s32 %s168, 1
      %p172 = scmp.eq.s32.totalorder %s24, 1
      %p173 = scmp.ne.s32.totalorder %s168, %s170
      %p174 = scmp.eq.s32.totalorder %s24, 0
      %p175 = por %p173, %p174
      %p176 = scmp.ne.s32.totalorder %s168, %s170
      %p177 = scmp.eq.s32.totalorder %s29, 1
      %p178 = por %p176, %p177
      %p179 = scmp.ne.s32.totalorder %s170, %s171
      %p180 = scmp.eq.s32.totalorder %s29, 0
      %p181 = por %p179, %p180
      %p182 = scmp.ne.s32.totalorder %s170, %s171
      %p183 = scmp.eq.s32.totalorder %s30, 1
      %p184 = por %p182, %p183
      %p186 = scmp.ne.s32.totalorder %s171, %s185
      %p187 = scmp.eq.s32.totalorder %s30, 0
      %p188 = por %p186, %p187
      %s190 = sadd.s32 %s189, 1
      %p193 = scmp.eq.s32.totalorder %s24, 1
      %p194 = scmp.ne.s32.totalorder %s189, %s191
      %p195 = scmp.eq.s32.totalorder %s24, 0
      %p196 = por %p194, %p195
      %p197 = scmp.ne.s32.totalorder %s189, %s191
      %p198 = scmp.eq.s32.totalorder %s29, 1
      %p199 = por %p197, %p198
      %p200 = scmp.ne.s32.totalorder %s191, %s192
      %p201 = scmp.eq.s32.totalorder %s29, 0
      %p202 = por %p200, %p201
      %p203 = scmp.ne.s32.totalorder %s191, %s192
      %p204 = scmp.eq.s32.totalorder %s30, 1
      %p205 = por %p203, %p204
      %p207 = scmp.ne.s32.totalorder %s192, %s206
      %p208 = scmp.eq.s32.totalorder %s30, 0
      %p209 = por %p207, %p208
      %s211 = sadd.s32 %s210, 1
      %p214 = scmp.eq.s32.totalorder %s24, 1
      %p215 = scmp.ne.s32.totalorder %s210, %s212
      %p216 = scmp.eq.s32.totalorder %s24, 0
      %p217 = por %p215, %p216
      %p218 = scmp.ne.s32.totalorder %s210, %s212
      %p219 = scmp.eq.s32.totalorder %s29, 1
      %p220 = por %p218, %p219
      %p221 = scmp.ne.s32.totalorder %s212, %s213
      %p222 = scmp.eq.s32.totalorder %s29, 0
      %p223 = por %p221, %p222
      %p224 = scmp.ne.s32.totalorder %s212, %s213
      %p225 = scmp.eq.s32.totalorder %s30, 1
      %p226 = por %p224, %p225
      %p228 = scmp.ne.s32.totalorder %s213, %s227
      %p229 = scmp.eq.s32.totalorder %s30, 0
      %p230 = por %p228, %p229
      %s232 = sadd.s32 %s231, 1
      %p235 = scmp.eq.s32.totalorder %s24, 1
      %p236 = scmp.ne.s32.totalorder %s231, %s233
      %p237 = scmp.eq.s32.totalorder %s24, 0
      %p238 = por %p236, %p237
      %p239 = scmp.ne.s32.totalorder %s231, %s233
      %p240 = scmp.eq.s32.totalorder %s29, 1
      %p241 = por %p239, %p240
      %p242 = scmp.ne.s32.totalorder %s233, %s234
      %p243 = scmp.eq.s32.totalorder %s29, 0
      %p244 = por %p242, %p243
      %p245 = scmp.ne.s32.totalorder %s233, %s234
      %p246 = scmp.eq.s32.totalorder %s30, 1
      %p247 = por %p245, %p246
      %p249 = scmp.ne.s32.totalorder %s234, %s248
      %p250 = scmp.eq.s32.totalorder %s30, 0
      %p251 = por %p249, %p250
      %s252 = ssub.s32 %s24, %s31
      %p253 = scmp.eq.s32.totalorder %s252, 0
      %s255 = sadd.s32 %s254, 1
      %s256 = scalar_select %p253, %s254, %s255
      %p259 = pneg %p253
      %p260 = scmp.eq.s32.totalorder %s24, 1
      %p261 = por %p259, %p260
      %p262 = scmp.ne.s32.totalorder %s254, %s257
      %p263 = scmp.eq.s32.totalorder %s24, 0
      %p264 = por %p262, %p263
      %p265 = scmp.ne.s32.totalorder %s254, %s257
      %p266 = scmp.eq.s32.totalorder %s29, 1
      %p267 = por %p265, %p266
      %p268 = scmp.ne.s32.totalorder %s257, %s258
      %p269 = scmp.eq.s32.totalorder %s29, 0
      %p270 = por %p268, %p269
      %p271 = scmp.ne.s32.totalorder %s257, %s258
      %p272 = scmp.eq.s32.totalorder %s30, 1
      %p273 = por %p271, %p272
      %p275 = scmp.ne.s32.totalorder %s258, %s274
      %p276 = scmp.eq.s32.totalorder %s30, 0
      %p277 = por %p275, %p276
      %s278 = ssub.s32 %s24, %s31
      %p279 = scmp.eq.s32.totalorder %s278, 0
      %s281 = sadd.s32 %s280, 1
      %s282 = scalar_select %p279, %s280, %s281
      %p285 = pneg %p279
      %p286 = scmp.eq.s32.totalorder %s24, 1
      %p287 = por %p285, %p286
      %p288 = scmp.ne.s32.totalorder %s280, %s283
      %p289 = scmp.eq.s32.totalorder %s24, 0
      %p290 = por %p288, %p289
      %p291 = scmp.ne.s32.totalorder %s280, %s283
      %p292 = scmp.eq.s32.totalorder %s29, 1
      %p293 = por %p291, %p292
      %p294 = scmp.ne.s32.totalorder %s283, %s284
      %p295 = scmp.eq.s32.totalorder %s29, 0
      %p296 = por %p294, %p295
      %p297 = scmp.ne.s32.totalorder %s283, %s284
      %p298 = scmp.eq.s32.totalorder %s30, 1
      %p299 = por %p297, %p298
      %p301 = scmp.ne.s32.totalorder %s284, %s300
      %p302 = scmp.eq.s32.totalorder %s30, 0
      %p303 = por %p301, %p302
      %p304 = scmp.le.s32.totalorder 1, %s24
      %p305 = scmp.lt.s32.totalorder %s24, 3
      %p306 = pnand %p304, %p305
      %p307 = pneg %p306
      // Predicated region
      $region9: #{encoder_layer.1} parent=5 // pred_check
        _
      $region10: #{encoder_layer.1} parent=5 // pred_check_branch
        %309 = sbr.rel (%p306) target = $region12
      $region11: #{encoder_layer.1} parent=5 // pred_region
        %s310 = ssub.s32 %s24, 1
        // Predicated region
        $region13: #{encoder_layer.1} parent=11 // pred_check
          %p311 = pneg %p97
        $region14: #{encoder_layer.1} parent=11 // pred_check_branch
          %313 = sbr.rel (%p311) target = $region16
        $region15: #{encoder_layer.1} parent=11 // pred_region
          _
        $region16: #{encoder_layer.1} parent=11 // pred_fallthru
          _
        // Predicated region
        $region17: #{encoder_layer.1} parent=11 // pred_check
          %p314 = pneg %p118
        $region18: #{encoder_layer.1} parent=11 // pred_check_branch
          %316 = sbr.rel (%p314) target = $region20
        $region19: #{encoder_layer.1} parent=11 // pred_region
          _
        $region20: #{encoder_layer.1} parent=11 // pred_fallthru
          _
        // Predicated region
        $region21: #{encoder_layer.1} parent=11 // pred_check
          %p317 = pneg %p139
        $region22: #{encoder_layer.1} parent=11 // pred_check_branch
          %319 = sbr.rel (%p317) target = $region24
        $region23: #{encoder_layer.1} parent=11 // pred_region
          _
        $region24: #{encoder_layer.1} parent=11 // pred_fallthru
          _
        // Predicated region
        $region25: #{encoder_layer.1} parent=11 // pred_check
          %p320 = pneg %p160
        $region26: #{encoder_layer.1} parent=11 // pred_check_branch
          %322 = sbr.rel (%p320) target = $region28
        $region27: #{encoder_layer.1} parent=11 // pred_region
          _
        $region28: #{encoder_layer.1} parent=11 // pred_fallthru
          _
        // Predicated region
        $region29: #{encoder_layer.1} parent=11 // pred_check
          %p323 = pneg %p181
        $region30: #{encoder_layer.1} parent=11 // pred_check_branch
          %325 = sbr.rel (%p323) target = $region32
        $region31: #{encoder_layer.1} parent=11 // pred_region
          _
        $region32: #{encoder_layer.1} parent=11 // pred_fallthru
          _
        // Predicated region
        $region33: #{encoder_layer.1} parent=11 // pred_check
          %p326 = pneg %p202
        $region34: #{encoder_layer.1} parent=11 // pred_check_branch
          %328 = sbr.rel (%p326) target = $region36
        $region35: #{encoder_layer.1} parent=11 // pred_region
          _
        $region36: #{encoder_layer.1} parent=11 // pred_fallthru
          _
        // Predicated region
        $region37: #{encoder_layer.1} parent=11 // pred_check
          %p329 = pneg %p223
        $region38: #{encoder_layer.1} parent=11 // pred_check_branch
          %331 = sbr.rel (%p329) target = $region40
        $region39: #{encoder_layer.1} parent=11 // pred_region
          _
        $region40: #{encoder_layer.1} parent=11 // pred_fallthru
          _
        // Predicated region
        $region41: #{encoder_layer.1} parent=11 // pred_check
          %p332 = pneg %p244
        $region42: #{encoder_layer.1} parent=11 // pred_check_branch
          %334 = sbr.rel (%p332) target = $region44
        $region43: #{encoder_layer.1} parent=11 // pred_region
          _
        $region44: #{encoder_layer.1} parent=11 // pred_fallthru
          _
      $region12: #{encoder_layer.1} parent=5 // pred_fallthru
        _
      %p335 = scmp.lt.s32.totalorder %s24, 2
      // Predicated region
      $region45: #{encoder_layer.1} parent=5 // pred_check
        %p336 = pneg %p335
      $region46: #{encoder_layer.1} parent=5 // pred_check_branch
        %338 = sbr.rel (%p336) target = $region48
      $region47: #{encoder_layer.1} parent=5 // pred_region
        // Predicated region
        $region49: #{encoder_layer.1} parent=47 // pred_check
          %p339 = pneg %p44
        $region50: #{encoder_layer.1} parent=47 // pred_check_branch
          %341 = sbr.rel (%p339) target = $region52
        $region51: #{encoder_layer.1} parent=47 // pred_region
          %p342 = scmp.lt.s32.totalorder %s24, 1
          %s343 = scalar_select %p342, %s24, 1
          %s344 = smul.addr %s343, 8
          %s345 = scalar_lea.vmem %s0, %s344
        $region52: #{encoder_layer.1} parent=47 // pred_fallthru
          _
        // Predicated region
        $region53: #{encoder_layer.1} parent=47 // pred_check
          %p346 = pneg %p70
        $region54: #{encoder_layer.1} parent=47 // pred_check_branch
          %348 = sbr.rel (%p346) target = $region56
        $region55: #{encoder_layer.1} parent=47 // pred_region
          %p349 = scmp.lt.s32.totalorder %s24, 1
          %s350 = scalar_select %p349, %s24, 1
          %s351 = smul.addr %s350, 2
          %s352 = scalar_lea.vmem %s1, %s351
        $region56: #{encoder_layer.1} parent=47 // pred_fallthru
          _
      $region48: #{encoder_layer.1} parent=5 // pred_fallthru
        _
      %p353 = scmp.le.s32.totalorder 1, %s24
      %p354 = scmp.lt.s32.totalorder %s24, 3
      %p355 = pnand %p353, %p354
      %p356 = pneg %p355
      // Predicated region
      $region57: #{encoder_layer.1} parent=5 // pred_check
        _
      $region58: #{encoder_layer.1} parent=5 // pred_check_branch
        %358 = sbr.rel (%p355) target = $region60
      $region59: #{encoder_layer.1} parent=5 // pred_region
        %s359 = ssub.s32 %s24, 1
        %p360 = scmp.lt.s32.totalorder %s29, 1
        %s361 = scalar_select %p360, %s29, 1
        %s362 = smul.addr %s361, 8
        %s363 = scalar_lea.vmem %s0, %s362
        %p364 = pneg %p50
        %p365 = pneg %p47
        %p366 = scmp.lt.s32.totalorder %s29, 1
        %s367 = scalar_select %p366, %s29, 1
        %s368 = smul.addr %s367, 2
        %s369 = scalar_lea.vmem %s1, %s368
        %p370 = pneg %p76
        %p371 = pneg %p73
        %p372 = pneg %p97
        %p373 = pneg %p94
        %p374 = pneg %p118
        %p375 = pneg %p115
        %p376 = pneg %p139
        %p377 = pneg %p136
        %p378 = pneg %p160
        %p379 = pneg %p157
        %p380 = pneg %p181
        %p381 = pneg %p178
        %p382 = pneg %p202
        %p383 = pneg %p199
        %p384 = pneg %p223
        %p385 = pneg %p220
        %p386 = pneg %p244
        %p387 = pneg %p241
        %p388 = pneg %p270
        %p389 = pneg %p267
        %s390 = sand.u32 %s257, 1
        %s391 = scalar_lea.sflag [#allocation3], %s390
        %s392 = sand.u32 %s257, 1
        %s393 = smul.addr %s392, 8
        %s394 = scalar_lea.vmem [#allocation2], %s393
        %p395 = pneg %p296
        %p396 = pneg %p293
        %s397 = sand.u32 %s283, 1
        %s398 = scalar_lea.sflag [#allocation5], %s397
        %s399 = sand.u32 %s283, 1
        %s400 = smul.addr %s399, 32
        %s401 = scalar_lea.vmem [#allocation4], %s400
        %p402 = scmp.lt.s32.totalorder %s29, 1
        %s403 = scalar_select %p402, %s29, 1
        %s404 = smul.addr %s403, 8
        %s405 = scalar_lea.vmem %s0, %s404
        %p406 = scmp.lt.s32.totalorder %s29, 1
        %s407 = scalar_select %p406, %s29, 1
        %s408 = smul.addr %s407, 2
        %s409 = scalar_lea.vmem %s1, %s408
        %v410 = vld [vmem:[%s405] sm:$0xff]
        %v411 = vld [vmem:[%s2] sm:$0xff]
        %v412 = vld [vmem:[%s2 + $0x8] sm:$0xff]
        %v413 = vld [vmem:[%s2 + $0x10] sm:$0xff]
        %v414 = vld [vmem:[%s2 + $0x18] sm:$0xff]
        %vm415 = vcmask 261120
        %v417 = vsel %vm415, %v410, 0
        %419 = vmatprep.subr.mxu0 0.0
        %420 = vmatpush1.msra.mxu0 %v411
        %421 = vmatprep.subr.mxu0 0.0
        %422 = vmatpush1.msra.mxu0 %v412
        %423 = vmatprep.subr.mxu0 0.0
        %424 = vmatpush1.msra.mxu0 %v413
        %425 = vmatprep.subr.mxu0 0.0
        %426 = vmatpush1.msra.mxu0 %v414
        %427 = vmatprep.subr.mxu0 0.0
        %428 = vmatpush1.msra.mxu0 0.0
        %429 = vmatprep.subr.mxu0 0.0
        %430 = vmatpush1.msra.mxu0 0.0
        %431 = vmatprep.subr.mxu0 0.0
        %432 = vmatpush1.msra.mxu0 0.0
        %433 = vmatprep.subr.mxu0 0.0
        %434 = vmatpush1.msra.mxu0 0.0
        %435 = vmatprep.subr.mxu0 0.0
        %436 = vmatpush1.msra.mxu0 0.0
        %437 = vmatprep.subr.mxu0 0.0
        %438 = vmatpush1.msra.mxu0 0.0
        %439 = vmatprep.subr.mxu0 0.0
        %440 = vmatpush1.msra.mxu0 0.0
        %441 = vmatprep.subr.mxu0 0.0
        %442 = vmatpush1.msra.mxu0 0.0
        %443 = vmatprep.subr.mxu0 0.0
        %444 = vmatpush1.msra.mxu0 0.0
        %445 = vmatprep.subr.mxu0 0.0
        %446 = vmatpush1.msra.mxu0 0.0
        %447 = vmatprep.subr.mxu0 0.0
        %448 = vmatpush1.msra.mxu0 0.0
        %449 = vmatprep.subr.mxu0 0.0
        %450 = vmatpush1.msra.mxu0 0.0
        %451 = vmatprep.subr.mxu0 0.0
        %452 = vmatpush1.msra.mxu0 0.0
        %453 = vmatprep.subr.mxu0 0.0
        %454 = vmatpush1.msra.mxu0 0.0
        %455 = vmatprep.subr.mxu0 0.0
        %456 = vmatpush1.msra.mxu0 0.0
        %457 = vmatprep.subr.mxu0 0.0
        %458 = vmatpush1.msra.mxu0 0.0
        %459 = vmatprep.subr.mxu0 0.0
        %460 = vmatpush1.msra.mxu0 0.0
        %461 = vmatprep.subr.mxu0 0.0
        %462 = vmatpush1.msra.mxu0 0.0
        %463 = vmatprep.subr.mxu0 0.0
        %464 = vmatpush1.msra.mxu0 0.0
        %465 = vmatprep.subr.mxu0 0.0
        %466 = vmatpush1.msra.mxu0 0.0
        %467 = vmatprep.subr.mxu0 0.0
        %468 = vmatpush1.msra.mxu0 0.0
        %469 = vmatprep.subr.mxu0 0.0
        %470 = vmatpush1.msra.mxu0 0.0
        %471 = vmatprep.subr.mxu0 0.0
        %472 = vmatpush1.msra.mxu0 0.0
        %473 = vmatprep.subr.mxu0 0.0
        %474 = vmatpush1.msra.mxu0 0.0
        %475 = vmatprep.subr.mxu0 0.0
        %476 = vmatpush1.msra.mxu0 0.0
        %477 = vmatprep.subr.mxu0 0.0
        %478 = vmatpush1.msra.mxu0 0.0
        %479 = vmatprep.subr.mxu0 0.0
        %480 = vmatpush1.msra.mxu0 0.0
        %481 = vmatprep.subr.mxu0 0.0
        %482 = vmatpush1.msra.mxu0 0.0
        %483 = vmatprep.mubr.f32.mxu0 0.0
        %484 = vmatmul.mubr.f32.gmra.mrb[0].mxu0 %v417
        %v485 = vpop.f32.mrb[0].mxu0
        %v486 = vadd.f32 0.0, %v485
        %v487 = vpop.f32.mrb[0].mxu0
        %488 = vdwg.mxu0
        %v489 = vmul.f32 %v486, 0.35355338
        %491 = vrot.lane.b32.xlu0 %v489, 120
        %v492 = vpop.permute.xlu0 %491
        %493 = vrot.lane.b32.xlu0 %v489, 112
        %v494 = vpop.permute.xlu0 %493
        %495 = vrot.lane.b32.xlu0 %v489, 104
        %v496 = vpop.permute.xlu0 %495
        %498 = vrot.lane.b32.xlu0 %v486, 120
        %v499 = vpop.permute.xlu0 %498
        %500 = vrot.lane.b32.xlu0 %v486, 112
        %v501 = vpop.permute.xlu0 %500
        %502 = vrot.lane.b32.xlu0 %v486, 104
        %v503 = vpop.permute.xlu0 %502
        %504 = vrot.lane.b32.xlu0 %v486, 96
        %v505 = vpop.permute.xlu0 %504
        %vm506 = vcmask 64512
        %v507 = vsel %vm506, %v489, 0
        %v509 = vsel %vm506, %v505, 0
        %511 = vmatprep.subr.mxu0 0.0
        %512 = vmatpush1.xpose.msra.mxu0 %v509
        %513 = vmatprep.subr.mxu0 0.0
        %514 = vmatpush1.xpose.msra.mxu0 0.0
        %515 = vmatprep.subr.mxu0 0.0
        %516 = vmatpush1.xpose.msra.mxu0 0.0
        %517 = vmatprep.subr.mxu0 0.0
        %518 = vmatpush1.xpose.msra.mxu0 0.0
        %519 = vmatprep.subr.mxu0 0.0
        %520 = vmatpush1.xpose.msra.mxu0 0.0
        %521 = vmatprep.subr.mxu0 0.0
        %522 = vmatpush1.xpose.msra.mxu0 0.0
        %523 = vmatprep.subr.mxu0 0.0
        %524 = vmatpush1.xpose.msra.mxu0 0.0
        %525 = vmatprep.subr.mxu0 0.0
        %526 = vmatpush1.xpose.msra.mxu0 0.0
        %527 = vmatprep.subr.mxu0 0.0
        %528 = vmatpush1.xpose.msra.mxu0 0.0
        %529 = vmatprep.subr.mxu0 0.0
        %530 = vmatpush1.xpose.msra.mxu0 0.0
        %531 = vmatprep.subr.mxu0 0.0
        %532 = vmatpush1.xpose.msra.mxu0 0.0
        %533 = vmatprep.subr.mxu0 0.0
        %534 = vmatpush1.xpose.msra.mxu0 0.0
        %535 = vmatprep.subr.mxu0 0.0
        %536 = vmatpush1.xpose.msra.mxu0 0.0
        %537 = vmatprep.subr.mxu0 0.0
        %538 = vmatpush1.xpose.msra.mxu0 0.0
        %539 = vmatprep.subr.mxu0 0.0
        %540 = vmatpush1.xpose.msra.mxu0 0.0
        %541 = vmatprep.subr.mxu0 0.0
        %542 = vmatpush1.xpose.msra.mxu0 0.0
        %543 = vmatprep.subr.mxu0 0.0
        %544 = vmatpush1.xpose.msra.mxu0 0.0
        %545 = vmatprep.subr.mxu0 0.0
        %546 = vmatpush1.xpose.msra.mxu0 0.0
        %547 = vmatprep.subr.mxu0 0.0
        %548 = vmatpush1.xpose.msra.mxu0 0.0
        %549 = vmatprep.subr.mxu0 0.0
        %550 = vmatpush1.xpose.msra.mxu0 0.0
        %551 = vmatprep.subr.mxu0 0.0
        %552 = vmatpush1.xpose.msra.mxu0 0.0
        %553 = vmatprep.subr.mxu0 0.0
        %554 = vmatpush1.xpose.msra.mxu0 0.0
        %555 = vmatprep.subr.mxu0 0.0
        %556 = vmatpush1.xpose.msra.mxu0 0.0
        %557 = vmatprep.subr.mxu0 0.0
        %558 = vmatpush1.xpose.msra.mxu0 0.0
        %559 = vmatprep.subr.mxu0 0.0
        %560 = vmatpush1.xpose.msra.mxu0 0.0
        %561 = vmatprep.subr.mxu0 0.0
        %562 = vmatpush1.xpose.msra.mxu0 0.0
        %563 = vmatprep.subr.mxu0 0.0
        %564 = vmatpush1.xpose.msra.mxu0 0.0
        %565 = vmatprep.subr.mxu0 0.0
        %566 = vmatpush1.xpose.msra.mxu0 0.0
        %567 = vmatprep.subr.mxu0 0.0
        %568 = vmatpush1.xpose.msra.mxu0 0.0
        %569 = vmatprep.subr.mxu0 0.0
        %570 = vmatpush1.xpose.msra.mxu0 0.0
        %571 = vmatprep.subr.mxu0 0.0
        %572 = vmatpush1.xpose.msra.mxu0 0.0
        %573 = vmatprep.subr.mxu0 0.0
        %574 = vmatpush1.xpose.msra.mxu0 0.0
        %575 = vmatprep.mubr.f32.mxu0 0.0
        %576 = vmatmul.mubr.f32.gmra.mrb[0].mxu0 %v507
        %v577 = vpop.f32.mrb[0].mxu0
        %v578 = vadd.f32 0.0, %v577
        %v579 = vpop.f32.mrb[0].mxu0
        %580 = vdwg.mxu0
        %581 = vrot.lane.b32.xlu0 %v499, 96
        %v582 = vpop.permute.xlu0 %581
        %v583 = vsel %vm506, %v492, 0
        %v585 = vsel %vm506, %v582, 0
        %587 = vmatprep.subr.mxu0 0.0
        %588 = vmatpush1.xpose.msra.mxu0 %v585
        %589 = vmatprep.subr.mxu0 0.0
        %590 = vmatpush1.xpose.msra.mxu0 0.0
        %591 = vmatprep.subr.mxu0 0.0
        %592 = vmatpush1.xpose.msra.mxu0 0.0
        %593 = vmatprep.subr.mxu0 0.0
        %594 = vmatpush1.xpose.msra.mxu0 0.0
        %595 = vmatprep.subr.mxu0 0.0
        %596 = vmatpush1.xpose.msra.mxu0 0.0
        %597 = vmatprep.subr.mxu0 0.0
        %598 = vmatpush1.xpose.msra.mxu0 0.0
        %599 = vmatprep.subr.mxu0 0.0
        %600 = vmatpush1.xpose.msra.mxu0 0.0
        %601 = vmatprep.subr.mxu0 0.0
        %602 = vmatpush1.xpose.msra.mxu0 0.0
        %603 = vmatprep.subr.mxu0 0.0
        %604 = vmatpush1.xpose.msra.mxu0 0.0
        %605 = vmatprep.subr.mxu0 0.0
        %606 = vmatpush1.xpose.msra.mxu0 0.0
        %607 = vmatprep.subr.mxu0 0.0
        %608 = vmatpush1.xpose.msra.mxu0 0.0
        %609 = vmatprep.subr.mxu0 0.0
        %610 = vmatpush1.xpose.msra.mxu0 0.0
        %611 = vmatprep.subr.mxu0 0.0
        %612 = vmatpush1.xpose.msra.mxu0 0.0
        %613 = vmatprep.subr.mxu0 0.0
        %614 = vmatpush1.xpose.msra.mxu0 0.0
        %615 = vmatprep.subr.mxu0 0.0
        %616 = vmatpush1.xpose.msra.mxu0 0.0
        %617 = vmatprep.subr.mxu0 0.0
        %618 = vmatpush1.xpose.msra.mxu0 0.0
        %619 = vmatprep.subr.mxu0 0.0
        %620 = vmatpush1.xpose.msra.mxu0 0.0
        %621 = vmatprep.subr.mxu0 0.0
        %622 = vmatpush1.xpose.msra.mxu0 0.0
        %623 = vmatprep.subr.mxu0 0.0
        %624 = vmatpush1.xpose.msra.mxu0 0.0
        %625 = vmatprep.subr.mxu0 0.0
        %626 = vmatpush1.xpose.msra.mxu0 0.0
        %627 = vmatprep.subr.mxu0 0.0
        %628 = vmatpush1.xpose.msra.mxu0 0.0
        %629 = vmatprep.subr.mxu0 0.0
        %630 = vmatpush1.xpose.msra.mxu0 0.0
        %631 = vmatprep.subr.mxu0 0.0
        %632 = vmatpush1.xpose.msra.mxu0 0.0
        %633 = vmatprep.subr.mxu0 0.0
        %634 = vmatpush1.xpose.msra.mxu0 0.0
        %635 = vmatprep.subr.mxu0 0.0
        %636 = vmatpush1.xpose.msra.mxu0 0.0
        %637 = vmatprep.subr.mxu0 0.0
        %638 = vmatpush1.xpose.msra.mxu0 0.0
        %639 = vmatprep.subr.mxu0 0.0
        %640 = vmatpush1.xpose.msra.mxu0 0.0
        %641 = vmatprep.subr.mxu0 0.0
        %642 = vmatpush1.xpose.msra.mxu0 0.0
        %643 = vmatprep.subr.mxu0 0.0
        %644 = vmatpush1.xpose.msra.mxu0 0.0
        %645 = vmatprep.subr.mxu0 0.0
        %646 = vmatpush1.xpose.msra.mxu0 0.0
        %647 = vmatprep.subr.mxu0 0.0
        %648 = vmatpush1.xpose.msra.mxu0 0.0
        %649 = vmatprep.subr.mxu0 0.0
        %650 = vmatpush1.xpose.msra.mxu0 0.0
        %651 = vmatprep.mubr.f32.mxu0 0.0
        %652 = vmatmul.mubr.f32.gmra.mrb[0].mxu0 %v583
        %v653 = vpop.f32.mrb[0].mxu0
        %v654 = vadd.f32 0.0, %v653
        %v655 = vpop.f32.mrb[0].mxu0
        %656 = vdwg.mxu0
        %657 = vrot.lane.b32.xlu0 %v501, 96
        %v658 = vpop.permute.xlu0 %657
        %v659 = vsel %vm506, %v494, 0
        %v661 = vsel %vm506, %v658, 0
        %663 = vmatprep.subr.mxu0 0.0
        %664 = vmatpush1.xpose.msra.mxu0 %v661
        %665 = vmatprep.subr.mxu0 0.0
        %666 = vmatpush1.xpose.msra.mxu0 0.0
        %667 = vmatprep.subr.mxu0 0.0
        %668 = vmatpush1.xpose.msra.mxu0 0.0
        %669 = vmatprep.subr.mxu0 0.0
        %670 = vmatpush1.xpose.msra.mxu0 0.0
        %671 = vmatprep.subr.mxu0 0.0
        %672 = vmatpush1.xpose.msra.mxu0 0.0
        %673 = vmatprep.subr.mxu0 0.0
        %674 = vmatpush1.xpose.msra.mxu0 0.0
        %675 = vmatprep.subr.mxu0 0.0
        %676 = vmatpush1.xpose.msra.mxu0 0.0
        %677 = vmatprep.subr.mxu0 0.0
        %678 = vmatpush1.xpose.msra.mxu0 0.0
        %679 = vmatprep.subr.mxu0 0.0
        %680 = vmatpush1.xpose.msra.mxu0 0.0
        %681 = vmatprep.subr.mxu0 0.0
        %682 = vmatpush1.xpose.msra.mxu0 0.0
        %683 = vmatprep.subr.mxu0 0.0
        %684 = vmatpush1.xpose.msra.mxu0 0.0
        %685 = vmatprep.subr.mxu0 0.0
        %686 = vmatpush1.xpose.msra.mxu0 0.0
        %687 = vmatprep.subr.mxu0 0.0
        %688 = vmatpush1.xpose.msra.mxu0 0.0
        %689 = vmatprep.subr.mxu0 0.0
        %690 = vmatpush1.xpose.msra.mxu0 0.0
        %691 = vmatprep.subr.mxu0 0.0
        %692 = vmatpush1.xpose.msra.mxu0 0.0
        %693 = vmatprep.subr.mxu0 0.0
        %694 = vmatpush1.xpose.msra.mxu0 0.0
        %695 = vmatprep.subr.mxu0 0.0
        %696 = vmatpush1.xpose.msra.mxu0 0.0
        %697 = vmatprep.subr.mxu0 0.0
        %698 = vmatpush1.xpose.msra.mxu0 0.0
        %699 = vmatprep.subr.mxu0 0.0
        %700 = vmatpush1.xpose.msra.mxu0 0.0
        %701 = vmatprep.subr.mxu0 0.0
        %702 = vmatpush1.xpose.msra.mxu0 0.0
        %703 = vmatprep.subr.mxu0 0.0
        %704 = vmatpush1.xpose.msra.mxu0 0.0
        %705 = vmatprep.subr.mxu0 0.0
        %706 = vmatpush1.xpose.msra.mxu0 0.0
        %707 = vmatprep.subr.mxu0 0.0
        %708 = vmatpush1.xpose.msra.mxu0 0.0
        %709 = vmatprep.subr.mxu0 0.0
        %710 = vmatpush1.xpose.msra.mxu0 0.0
        %711 = vmatprep.subr.mxu0 0.0
        %712 = vmatpush1.xpose.msra.mxu0 0.0
        %713 = vmatprep.subr.mxu0 0.0
        %714 = vmatpush1.xpose.msra.mxu0 0.0
        %715 = vmatprep.subr.mxu0 0.0
        %716 = vmatpush1.xpose.msra.mxu0 0.0
        %717 = vmatprep.subr.mxu0 0.0
        %718 = vmatpush1.xpose.msra.mxu0 0.0
        %719 = vmatprep.subr.mxu0 0.0
        %720 = vmatpush1.xpose.msra.mxu0 0.0
        %721 = vmatprep.subr.mxu0 0.0
        %722 = vmatpush1.xpose.msra.mxu0 0.0
        %723 = vmatprep.subr.mxu0 0.0
        %724 = vmatpush1.xpose.msra.mxu0 0.0
        %725 = vmatprep.subr.mxu0 0.0
        %726 = vmatpush1.xpose.msra.mxu0 0.0
        %727 = vmatprep.mubr.f32.mxu0 0.0
        %728 = vmatmul.mubr.f32.gmra.mrb[0].mxu0 %v659
        %v729 = vpop.f32.mrb[0].mxu0
        %v730 = vadd.f32 0.0, %v729
        %v731 = vpop.f32.mrb[0].mxu0
        %732 = vdwg.mxu0
        %733 = vrot.lane.b32.xlu0 %v503, 96
        %v734 = vpop.permute.xlu0 %733
        %v735 = vsel %vm506, %v496, 0
        %v737 = vsel %vm506, %v734, 0
        %739 = vmatprep.subr.mxu0 0.0
        %740 = vmatpush1.xpose.msra.mxu0 %v737
        %741 = vmatprep.subr.mxu0 0.0
        %742 = vmatpush1.xpose.msra.mxu0 0.0
        %743 = vmatprep.subr.mxu0 0.0
        %744 = vmatpush1.xpose.msra.mxu0 0.0
        %745 = vmatprep.subr.mxu0 0.0
        %746 = vmatpush1.xpose.msra.mxu0 0.0
        %747 = vmatprep.subr.mxu0 0.0
        %748 = vmatpush1.xpose.msra.mxu0 0.0
        %749 = vmatprep.subr.mxu0 0.0
        %750 = vmatpush1.xpose.msra.mxu0 0.0
        %751 = vmatprep.subr.mxu0 0.0
        %752 = vmatpush1.xpose.msra.mxu0 0.0
        %753 = vmatprep.subr.mxu0 0.0
        %754 = vmatpush1.xpose.msra.mxu0 0.0
        %755 = vmatprep.subr.mxu0 0.0
        %756 = vmatpush1.xpose.msra.mxu0 0.0
        %757 = vmatprep.subr.mxu0 0.0
        %758 = vmatpush1.xpose.msra.mxu0 0.0
        %759 = vmatprep.subr.mxu0 0.0
        %760 = vmatpush1.xpose.msra.mxu0 0.0
        %761 = vmatprep.subr.mxu0 0.0
        %762 = vmatpush1.xpose.msra.mxu0 0.0
        %763 = vmatprep.subr.mxu0 0.0
        %764 = vmatpush1.xpose.msra.mxu0 0.0
        %765 = vmatprep.subr.mxu0 0.0
        %766 = vmatpush1.xpose.msra.mxu0 0.0
        %767 = vmatprep.subr.mxu0 0.0
        %768 = vmatpush1.xpose.msra.mxu0 0.0
        %769 = vmatprep.subr.mxu0 0.0
        %770 = vmatpush1.xpose.msra.mxu0 0.0
        %771 = vmatprep.subr.mxu0 0.0
        %772 = vmatpush1.xpose.msra.mxu0 0.0
        %773 = vmatprep.subr.mxu0 0.0
        %774 = vmatpush1.xpose.msra.mxu0 0.0
        %775 = vmatprep.subr.mxu0 0.0
        %776 = vmatpush1.xpose.msra.mxu0 0.0
        %777 = vmatprep.subr.mxu0 0.0
        %778 = vmatpush1.xpose.msra.mxu0 0.0
        %779 = vmatprep.subr.mxu0 0.0
        %780 = vmatpush1.xpose.msra.mxu0 0.0
        %781 = vmatprep.subr.mxu0 0.0
        %782 = vmatpush1.xpose.msra.mxu0 0.0
        %783 = vmatprep.subr.mxu0 0.0
        %784 = vmatpush1.xpose.msra.mxu0 0.0
        %785 = vmatprep.subr.mxu0 0.0
        %786 = vmatpush1.xpose.msra.mxu0 0.0
        %787 = vmatprep.subr.mxu0 0.0
        %788 = vmatpush1.xpose.msra.mxu0 0.0
        %789 = vmatprep.subr.mxu0 0.0
        %790 = vmatpush1.xpose.msra.mxu0 0.0
        %791 = vmatprep.subr.mxu0 0.0
        %792 = vmatpush1.xpose.msra.mxu0 0.0
        %793 = vmatprep.subr.mxu0 0.0
        %794 = vmatpush1.xpose.msra.mxu0 0.0
        %795 = vmatprep.subr.mxu0 0.0
        %796 = vmatpush1.xpose.msra.mxu0 0.0
        %797 = vmatprep.subr.mxu0 0.0
        %798 = vmatpush1.xpose.msra.mxu0 0.0
        %799 = vmatprep.subr.mxu0 0.0
        %800 = vmatpush1.xpose.msra.mxu0 0.0
        %801 = vmatprep.subr.mxu0 0.0
        %802 = vmatpush1.xpose.msra.mxu0 0.0
        %803 = vmatprep.mubr.f32.mxu0 0.0
        %804 = vmatmul.mubr.f32.gmra.mrb[0].mxu0 %v735
        %v805 = vpop.f32.mrb[0].mxu0
        %v806 = vadd.f32 0.0, %v805
        %v807 = vpop.f32.mrb[0].mxu0
        %808 = vdwg.mxu0
        %v809 = vld [vmem:[%s409] sm:$0x3]
        %v810 = vunpack.c.0.s8 %v809
        %v811 = vcvt.s32.f32 %v810
        %v812 = vmul.f32 %v811, -1e+09
        %v813 = vadd.f32 %v578, %v812
        %v814 = vadd.f32 %v654, %v812
        %v815 = vadd.f32 %v730, %v812
        %v816 = vadd.f32 %v806, %v812
        %v817 = vsel %vm506, %v813, -inf
        %818 = vmax.xlane.f32.xlu0 %v817
        %v819 = vpop.xlane.xlu0 %818
        %v820 = vsel %vm506, %v814, -inf
        %821 = vmax.xlane.f32.xlu0 %v820
        %v822 = vpop.xlane.xlu0 %821
        %v823 = vsel %vm506, %v815, -inf
        %824 = vmax.xlane.f32.xlu0 %v823
        %v825 = vpop.xlane.xlu0 %824
        %v826 = vsel %vm506, %v816, -inf
        %827 = vmax.xlane.f32.xlu0 %v826
        %v828 = vpop.xlane.xlu0 %827
        %v829 = vsub.f32 %v813, %v819
        %v830 = vsub.f32 %v814, %v822
        %v831 = vsub.f32 %v815, %v825
        %v832 = vsub.f32 %v816, %v828
        %v833 = vmul.f32 %v829, 1.442695
        %v834 = vpow.pop %v833
        %v835 = vmul.f32 %v830, 1.442695
        %v836 = vpow.pop %v835
        %v837 = vmul.f32 %v831, 1.442695
        %v838 = vpow.pop %v837
        %v839 = vmul.f32 %v832, 1.442695
        %v840 = vpow.pop %v839
        %v841 = vsel %vm506, %v834, 0.0
        %842 = vadd.xlane.f32.xlu0 %v841
        %v843 = vpop.xlane.xlu0 %842
        %v844 = vsel %vm506, %v836, 0.0
        %845 = vadd.xlane.f32.xlu0 %v844
        %v846 = vpop.xlane.xlu0 %845
        %v847 = vsel %vm506, %v838, 0.0
        %848 = vadd.xlane.f32.xlu0 %v847
        %v849 = vpop.xlane.xlu0 %848
        %v850 = vsel %vm506, %v840, 0.0
        %851 = vadd.xlane.f32.xlu0 %v850
        %v852 = vpop.xlane.xlu0 %851
        %v853 = vrcp.pop %v843
        %v854 = vrcp.pop %v846
        %v855 = vrcp.pop %v849
        %v856 = vrcp.pop %v852
        %v857 = vmul.f32 %v834, %v853
        %v858 = vmul.f32 %v836, %v854
        %v859 = vmul.f32 %v838, %v855
        %v860 = vmul.f32 %v840, %v856
        %861 = vst.msk [vmem:[%s401] sm:$0xff] %vm506, %v857
        %862 = vst.msk [vmem:[%s401 + $0x8] sm:$0xff] %vm506, %v858
        %863 = vst.msk [vmem:[%s401 + $0x10] sm:$0xff] %vm506, %v859
        %864 = vst.msk [vmem:[%s401 + $0x18] sm:$0xff] %vm506, %v860
        %865 = vrot.lane.b32.xlu0 %v486, 64
        %v866 = vpop.permute.xlu0 %865
        %v869 = vsel %vm506, %v857, 0
        %871 = vmatprep.subr.mxu0 0.0
        %872 = vmatpush1.msra.mxu0 %v866
        %873 = vmatprep.subr.mxu0 0.0
        %874 = vmatpush1.msra.mxu0 0.0
        %875 = vmatprep.subr.mxu0 0.0
        %876 = vmatpush1.msra.mxu0 0.0
        %877 = vmatprep.subr.mxu0 0.0
        %878 = vmatpush1.msra.mxu0 0.0
        %879 = vmatprep.subr.mxu0 0.0
        %880 = vmatpush1.msra.mxu0 0.0
        %881 = vmatprep.subr.mxu0 0.0
        %882 = vmatpush1.msra.mxu0 0.0
        %883 = vmatprep.subr.mxu0 0.0
        %884 = vmatpush1.msra.mxu0 0.0
        %885 = vmatprep.subr.mxu0 0.0
        %886 = vmatpush1.msra.mxu0 0.0
        %887 = vmatprep.subr.mxu0 0.0
        %888 = vmatpush1.msra.mxu0 0.0
        %889 = vmatprep.subr.mxu0 0.0
        %890 = vmatpush1.msra.mxu0 0.0
        %891 = vmatprep.subr.mxu0 0.0
        %892 = vmatpush1.msra.mxu0 0.0
        %893 = vmatprep.subr.mxu0 0.0
        %894 = vmatpush1.msra.mxu0 0.0
        %895 = vmatprep.subr.mxu0 0.0
        %896 = vmatpush1.msra.mxu0 0.0
        %897 = vmatprep.subr.mxu0 0.0
        %898 = vmatpush1.msra.mxu0 0.0
        %899 = vmatprep.subr.mxu0 0.0
        %900 = vmatpush1.msra.mxu0 0.0
        %901 = vmatprep.subr.mxu0 0.0
        %902 = vmatpush1.msra.mxu0 0.0
        %903 = vmatprep.subr.mxu0 0.0
        %904 = vmatpush1.msra.mxu0 0.0
        %905 = vmatprep.subr.mxu0 0.0
        %906 = vmatpush1.msra.mxu0 0.0
        %907 = vmatprep.subr.mxu0 0.0
        %908 = vmatpush1.msra.mxu0 0.0
        %909 = vmatprep.subr.mxu0 0.0
        %910 = vmatpush1.msra.mxu0 0.0
        %911 = vmatprep.subr.mxu0 0.0
        %912 = vmatpush1.msra.mxu0 0.0
        %913 = vmatprep.subr.mxu0 0.0
        %914 = vmatpush1.msra.mxu0 0.0
        %915 = vmatprep.subr.mxu0 0.0
        %916 = vmatpush1.msra.mxu0 0.0
        %917 = vmatprep.subr.mxu0 0.0
        %918 = vmatpush1.msra.mxu0 0.0
        %919 = vmatprep.subr.mxu0 0.0
        %920 = vmatpush1.msra.mxu0 0.0
        %921 = vmatprep.subr.mxu0 0.0
        %922 = vmatpush1.msra.mxu0 0.0
        %923 = vmatprep.subr.mxu0 0.0
        %924 = vmatpush1.msra.mxu0 0.0
        %925 = vmatprep.subr.mxu0 0.0
        %926 = vmatpush1.msra.mxu0 0.0
        %927 = vmatprep.subr.mxu0 0.0
        %928 = vmatpush1.msra.mxu0 0.0
        %929 = vmatprep.subr.mxu0 0.0
        %930 = vmatpush1.msra.mxu0 0.0
        %931 = vmatprep.subr.mxu0 0.0
        %932 = vmatpush1.msra.mxu0 0.0
        %933 = vmatprep.subr.mxu0 0.0
        %934 = vmatpush1.msra.mxu0 0.0
        %935 = vmatprep.mubr.f32.mxu0 0.0
        %936 = vmatmul.mubr.f32.gmra.mrb[0].mxu0 %v869
        %v937 = vpop.f32.mrb[0].mxu0
        %v938 = vadd.f32 0.0, %v937
        %v939 = vpop.f32.mrb[0].mxu0
        %940 = vdwg.mxu0
        %941 = vrot.lane.b32.xlu0 %v499, 64
        %v942 = vpop.permute.xlu0 %941
        %v945 = vsel %vm506, %v858, 0
        %947 = vmatprep.subr.mxu0 0.0
        %948 = vmatpush1.msra.mxu0 %v942
        %949 = vmatprep.subr.mxu0 0.0
        %950 = vmatpush1.msra.mxu0 0.0
        %951 = vmatprep.subr.mxu0 0.0
        %952 = vmatpush1.msra.mxu0 0.0
        %953 = vmatprep.subr.mxu0 0.0
        %954 = vmatpush1.msra.mxu0 0.0
        %955 = vmatprep.subr.mxu0 0.0
        %956 = vmatpush1.msra.mxu0 0.0
        %957 = vmatprep.subr.mxu0 0.0
        %958 = vmatpush1.msra.mxu0 0.0
        %959 = vmatprep.subr.mxu0 0.0
        %960 = vmatpush1.msra.mxu0 0.0
        %961 = vmatprep.subr.mxu0 0.0
        %962 = vmatpush1.msra.mxu0 0.0
        %963 = vmatprep.subr.mxu0 0.0
        %964 = vmatpush1.msra.mxu0 0.0
        %965 = vmatprep.subr.mxu0 0.0
        %966 = vmatpush1.msra.mxu0 0.0
        %967 = vmatprep.subr.mxu0 0.0
        %968 = vmatpush1.msra.mxu0 0.0
        %969 = vmatprep.subr.mxu0 0.0
        %970 = vmatpush1.msra.mxu0 0.0
        %971 = vmatprep.subr.mxu0 0.0
        %972 = vmatpush1.msra.mxu0 0.0
        %973 = vmatprep.subr.mxu0 0.0
        %974 = vmatpush1.msra.mxu0 0.0
        %975 = vmatprep.subr.mxu0 0.0
        %976 = vmatpush1.msra.mxu0 0.0
        %977 = vmatprep.subr.mxu0 0.0
        %978 = vmatpush1.msra.mxu0 0.0
        %979 = vmatprep.subr.mxu0 0.0
        %980 = vmatpush1.msra.mxu0 0.0
        %981 = vmatprep.subr.mxu0 0.0
        %982 = vmatpush1.msra.mxu0 0.0
        %983 = vmatprep.subr.mxu0 0.0
        %984 = vmatpush1.msra.mxu0 0.0
        %985 = vmatprep.subr.mxu0 0.0
        %986 = vmatpush1.msra.mxu0 0.0
        %987 = vmatprep.subr.mxu0 0.0
        %988 = vmatpush1.msra.mxu0 0.0
        %989 = vmatprep.subr.mxu0 0.0
        %990 = vmatpush1.msra.mxu0 0.0
        %991 = vmatprep.subr.mxu0 0.0
        %992 = vmatpush1.msra.mxu0 0.0
        %993 = vmatprep.subr.mxu0 0.0
        %994 = vmatpush1.msra.mxu0 0.0
        %995 = vmatprep.subr.mxu0 0.0
        %996 = vmatpush1.msra.mxu0 0.0
        %997 = vmatprep.subr.mxu0 0.0
        %998 = vmatpush1.msra.mxu0 0.0
        %999 = vmatprep.subr.mxu0 0.0
        %1000 = vmatpush1.msra.mxu0 0.0
        %1001 = vmatprep.subr.mxu0 0.0
        %1002 = vmatpush1.msra.mxu0 0.0
        %1003 = vmatprep.subr.mxu0 0.0
        %1004 = vmatpush1.msra.mxu0 0.0
        %1005 = vmatprep.subr.mxu0 0.0
        %1006 = vmatpush1.msra.mxu0 0.0
        %1007 = vmatprep.subr.mxu0 0.0
        %1008 = vmatpush1.msra.mxu0 0.0
        %1009 = vmatprep.subr.mxu0 0.0
        %1010 = vmatpush1.msra.mxu0 0.0
        %1011 = vmatprep.mubr.f32.mxu0 0.0
        %1012 = vmatmul.mubr.f32.gmra.mrb[0].mxu0 %v945
        %v1013 = vpop.f32.mrb[0].mxu0
        %v1014 = vadd.f32 0.0, %v1013
        %v1015 = vpop.f32.mrb[0].mxu0
        %1016 = vdwg.mxu0
        %1017 = vrot.lane.b32.xlu0 %v501, 64
        %v1018 = vpop.permute.xlu0 %1017
        %v1021 = vsel %vm506, %v859, 0
        %1023 = vmatprep.subr.mxu0 0.0
        %1024 = vmatpush1.msra.mxu0 %v1018
        %1025 = vmatprep.subr.mxu0 0.0
        %1026 = vmatpush1.msra.mxu0 0.0
        %1027 = vmatprep.subr.mxu0 0.0
        %1028 = vmatpush1.msra.mxu0 0.0
        %1029 = vmatprep.subr.mxu0 0.0
        %1030 = vmatpush1.msra.mxu0 0.0
        %1031 = vmatprep.subr.mxu0 0.0
        %1032 = vmatpush1.msra.mxu0 0.0
        %1033 = vmatprep.subr.mxu0 0.0
        %1034 = vmatpush1.msra.mxu0 0.0
        %1035 = vmatprep.subr.mxu0 0.0
        %1036 = vmatpush1.msra.mxu0 0.0
        %1037 = vmatprep.subr.mxu0 0.0
        %1038 = vmatpush1.msra.mxu0 0.0
        %1039 = vmatprep.subr.mxu0 0.0
        %1040 = vmatpush1.msra.mxu0 0.0
        %1041 = vmatprep.subr.mxu0 0.0
        %1042 = vmatpush1.msra.mxu0 0.0
        %1043 = vmatprep.subr.mxu0 0.0
        %1044 = vmatpush1.msra.mxu0 0.0
        %1045 = vmatprep.subr.mxu0 0.0
        %1046 = vmatpush1.msra.mxu0 0.0
        %1047 = vmatprep.subr.mxu0 0.0
        %1048 = vmatpush1.msra.mxu0 0.0
        %1049 = vmatprep.subr.mxu0 0.0
        %1050 = vmatpush1.msra.mxu0 0.0
        %1051 = vmatprep.subr.mxu0 0.0
        %1052 = vmatpush1.msra.mxu0 0.0
        %1053 = vmatprep.subr.mxu0 0.0
        %1054 = vmatpush1.msra.mxu0 0.0
        %1055 = vmatprep.subr.mxu0 0.0
        %1056 = vmatpush1.msra.mxu0 0.0
        %1057 = vmatprep.subr.mxu0 0.0
        %1058 = vmatpush1.msra.mxu0 0.0
        %1059 = vmatprep.subr.mxu0 0.0
        %1060 = vmatpush1.msra.mxu0 0.0
        %1061 = vmatprep.subr.mxu0 0.0
        %1062 = vmatpush1.msra.mxu0 0.0
        %1063 = vmatprep.subr.mxu0 0.0
        %1064 = vmatpush1.msra.mxu0 0.0
        %1065 = vmatprep.subr.mxu0 0.0
        %1066 = vmatpush1.msra.mxu0 0.0
        %1067 = vmatprep.subr.mxu0 0.0
        %1068 = vmatpush1.msra.mxu0 0.0
        %1069 = vmatprep.subr.mxu0 0.0
        %1070 = vmatpush1.msra.mxu0 0.0
        %1071 = vmatprep.subr.mxu0 0.0
        %1072 = vmatpush1.msra.mxu0 0.0
        %1073 = vmatprep.subr.mxu0 0.0
        %1074 = vmatpush1.msra.mxu0 0.0
        %1075 = vmatprep.subr.mxu0 0.0
        %1076 = vmatpush1.msra.mxu0 0.0
        %1077 = vmatprep.subr.mxu0 0.0
        %1078 = vmatpush1.msra.mxu0 0.0
        %1079 = vmatprep.subr.mxu0 0.0
        %1080 = vmatpush1.msra.mxu0 0.0
        %1081 = vmatprep.subr.mxu0 0.0
        %1082 = vmatpush1.msra.mxu0 0.0
        %1083 = vmatprep.subr.mxu0 0.0
        %1084 = vmatpush1.msra.mxu0 0.0
        %1085 = vmatprep.subr.mxu0 0.0
        %1086 = vmatpush1.msra.mxu0 0.0
        %1087 = vmatprep.mubr.f32.mxu0 0.0
        %1088 = vmatmul.mubr.f32.gmra.mrb[0].mxu0 %v1021
        %v1089 = vpop.f32.mrb[0].mxu0
        %v1090 = vadd.f32 0.0, %v1089
        %v1091 = vpop.f32.mrb[0].mxu0
        %1092 = vdwg.mxu0
        %1093 = vrot.lane.b32.xlu0 %v503, 64
        %v1094 = vpop.permute.xlu0 %1093
        %v1097 = vsel %vm506, %v860, 0
        %1099 = vmatprep.subr.mxu0 0.0
        %1100 = vmatpush1.msra.mxu0 %v1094
        %1101 = vmatprep.subr.mxu0 0.0
        %1102 = vmatpush1.msra.mxu0 0.0
        %1103 = vmatprep.subr.mxu0 0.0
        %1104 = vmatpush1.msra.mxu0 0.0
        %1105 = vmatprep.subr.mxu0 0.0
        %1106 = vmatpush1.msra.mxu0 0.0
        %1107 = vmatprep.subr.mxu0 0.0
        %1108 = vmatpush1.msra.mxu0 0.0
        %1109 = vmatprep.subr.mxu0 0.0
        %1110 = vmatpush1.msra.mxu0 0.0
        %1111 = vmatprep.subr.mxu0 0.0
        %1112 = vmatpush1.msra.mxu0 0.0
        %1113 = vmatprep.subr.mxu0 0.0
        %1114 = vmatpush1.msra.mxu0 0.0
        %1115 = vmatprep.subr.mxu0 0.0
        %1116 = vmatpush1.msra.mxu0 0.0
        %1117 = vmatprep.subr.mxu0 0.0
        %1118 = vmatpush1.msra.mxu0 0.0
        %1119 = vmatprep.subr.mxu0 0.0
        %1120 = vmatpush1.msra.mxu0 0.0
        %1121 = vmatprep.subr.mxu0 0.0
        %1122 = vmatpush1.msra.mxu0 0.0
        %1123 = vmatprep.subr.mxu0 0.0
        %1124 = vmatpush1.msra.mxu0 0.0
        %1125 = vmatprep.subr.mxu0 0.0
        %1126 = vmatpush1.msra.mxu0 0.0
        %1127 = vmatprep.subr.mxu0 0.0
        %1128 = vmatpush1.msra.mxu0 0.0
        %1129 = vmatprep.subr.mxu0 0.0
        %1130 = vmatpush1.msra.mxu0 0.0
        %1131 = vmatprep.subr.mxu0 0.0
        %1132 = vmatpush1.msra.mxu0 0.0
        %1133 = vmatprep.subr.mxu0 0.0
        %1134 = vmatpush1.msra.mxu0 0.0
        %1135 = vmatprep.subr.mxu0 0.0
        %1136 = vmatpush1.msra.mxu0 0.0
        %1137 = vmatprep.subr.mxu0 0.0
        %1138 = vmatpush1.msra.mxu0 0.0
        %1139 = vmatprep.subr.mxu0 0.0
        %1140 = vmatpush1.msra.mxu0 0.0
        %1141 = vmatprep.subr.mxu0 0.0
        %1142 = vmatpush1.msra.mxu0 0.0
        %1143 = vmatprep.subr.mxu0 0.0
        %1144 = vmatpush1.msra.mxu0 0.0
        %1145 = vmatprep.subr.mxu0 0.0
        %1146 = vmatpush1.msra.mxu0 0.0
        %1147 = vmatprep.subr.mxu0 0.0
        %1148 = vmatpush1.msra.mxu0 0.0
        %1149 = vmatprep.subr.mxu0 0.0
        %1150 = vmatpush1.msra.mxu0 0.0
        %1151 = vmatprep.subr.mxu0 0.0
        %1152 = vmatpush1.msra.mxu0 0.0
        %1153 = vmatprep.subr.mxu0 0.0
        %1154 = vmatpush1.msra.mxu0 0.0
        %1155 = vmatprep.subr.mxu0 0.0
        %1156 = vmatpush1.msra.mxu0 0.0
        %1157 = vmatprep.subr.mxu0 0.0
        %1158 = vmatpush1.msra.mxu0 0.0
        %1159 = vmatprep.subr.mxu0 0.0
        %1160 = vmatpush1.msra.mxu0 0.0
        %1161 = vmatprep.subr.mxu0 0.0
        %1162 = vmatpush1.msra.mxu0 0.0
        %1163 = vmatprep.mubr.f32.mxu0 0.0
        %1164 = vmatmul.mubr.f32.gmra.mrb[0].mxu0 %v1097
        %v1165 = vpop.f32.mrb[0].mxu0
        %v1166 = vadd.f32 0.0, %v1165
        %v1167 = vpop.f32.mrb[0].mxu0
        %1168 = vdwg.mxu0
        %1170 = vrot.lane.b32.xlu0 %v1014, 8
        %v1171 = vpop.permute.xlu0 %1170
        %1174 = vrot.lane.b32.xlu0 %v1090, 16
        %v1175 = vpop.permute.xlu0 %1174
        %1178 = vrot.lane.b32.xlu0 %v1166, 24
        %v1179 = vpop.permute.xlu0 %1178
        %v1181 = vsel %vm506, %v938, %v1171
        %vm1182 = vcmask 130048
        %v1183 = vsel %vm1182, %v1181, %v1175
        %vm1184 = vcmask 195584
        %v1185 = vsel %vm1184, %v1183, %v1179
        %v1186 = vld [vmem:[%s3] sm:$0xff]
        %v1187 = vld [vmem:[%s3 + $0x8] sm:$0xff]
        %v1188 = vld [vmem:[%s3 + $0x10] sm:$0xff]
        %v1189 = vld [vmem:[%s3 + $0x18] sm:$0xff]
        %v1191 = vsel %vm415, %v1185, 0
        %1193 = vmatprep.subr.mxu0 0.0
        %1194 = vmatpush1.msra.mxu0 %v1186
        %1195 = vmatprep.subr.mxu0 0.0
        %1196 = vmatpush1.msra.mxu0 %v1187
        %1197 = vmatprep.subr.mxu0 0.0
        %1198 = vmatpush1.msra.mxu0 %v1188
        %1199 = vmatprep.subr.mxu0 0.0
        %1200 = vmatpush1.msra.mxu0 %v1189
        %1201 = vmatprep.subr.mxu0 0.0
        %1202 = vmatpush1.msra.mxu0 0.0
        %1203 = vmatprep.subr.mxu0 0.0
        %1204 = vmatpush1.msra.mxu0 0.0
        %1205 = vmatprep.subr.mxu0 0.0
        %1206 = vmatpush1.msra.mxu0 0.0
        %1207 = vmatprep.subr.mxu0 0.0
        %1208 = vmatpush1.msra.mxu0 0.0
        %1209 = vmatprep.subr.mxu0 0.0
        %1210 = vmatpush1.msra.mxu0 0.0
        %1211 = vmatprep.subr.mxu0 0.0
        %1212 = vmatpush1.msra.mxu0 0.0
        %1213 = vmatprep.subr.mxu0 0.0
        %1214 = vmatpush1.msra.mxu0 0.0
        %1215 = vmatprep.subr.mxu0 0.0
        %1216 = vmatpush1.msra.mxu0 0.0
        %1217 = vmatprep.subr.mxu0 0.0
        %1218 = vmatpush1.msra.mxu0 0.0
        %1219 = vmatprep.subr.mxu0 0.0
        %1220 = vmatpush1.msra.mxu0 0.0
        %1221 = vmatprep.subr.mxu0 0.0
        %1222 = vmatpush1.msra.mxu0 0.0
        %1223 = vmatprep.subr.mxu0 0.0
        %1224 = vmatpush1.msra.mxu0 0.0
        %1225 = vmatprep.subr.mxu0 0.0
        %1226 = vmatpush1.msra.mxu0 0.0
        %1227 = vmatprep.subr.mxu0 0.0
        %1228 = vmatpush1.msra.mxu0 0.0
        %1229 = vmatprep.subr.mxu0 0.0
        %1230 = vmatpush1.msra.mxu0 0.0
        %1231 = vmatprep.subr.mxu0 0.0
        %1232 = vmatpush1.msra.mxu0 0.0
        %1233 = vmatprep.subr.mxu0 0.0
        %1234 = vmatpush1.msra.mxu0 0.0
        %1235 = vmatprep.subr.mxu0 0.0
        %1236 = vmatpush1.msra.mxu0 0.0
        %1237 = vmatprep.subr.mxu0 0.0
        %1238 = vmatpush1.msra.mxu0 0.0
        %1239 = vmatprep.subr.mxu0 0.0
        %1240 = vmatpush1.msra.mxu0 0.0
        %1241 = vmatprep.subr.mxu0 0.0
        %1242 = vmatpush1.msra.mxu0 0.0
        %1243 = vmatprep.subr.mxu0 0.0
        %1244 = vmatpush1.msra.mxu0 0.0
        %1245 = vmatprep.subr.mxu0 0.0
        %1246 = vmatpush1.msra.mxu0 0.0
        %1247 = vmatprep.subr.mxu0 0.0
        %1248 = vmatpush1.msra.mxu0 0.0
        %1249 = vmatprep.subr.mxu0 0.0
        %1250 = vmatpush1.msra.mxu0 0.0
        %1251 = vmatprep.subr.mxu0 0.0
        %1252 = vmatpush1.msra.mxu0 0.0
        %1253 = vmatprep.subr.mxu0 0.0
        %1254 = vmatpush1.msra.mxu0 0.0
        %1255 = vmatprep.subr.mxu0 0.0
        %1256 = vmatpush1.msra.mxu0 0.0
        %1257 = vmatprep.mubr.f32.mxu0 0.0
        %1258 = vmatmul.mubr.f32.gmra.mrb[0].mxu0 %v1191
        %v1259 = vpop.f32.mrb[0].mxu0
        %v1260 = vadd.f32 %v410, %v1259
        %v1261 = vpop.f32.mrb[0].mxu0
        %1262 = vdwg.mxu0
        %v1263 = vld [vmem:[%s4] sm:$0x1]
        %v1264 = vld [vmem:[%s5] sm:$0x1]
        %v1265 = vsel %vm415, %v1260, 0.0
        %1266 = vadd.xlane.f32.xlu0 %v1265
        %v1267 = vpop.xlane.xlu0 %1266
        %v1268 = vrcp.pop 32.0
        %v1269 = vmul.f32 %v1267, %v1268
        %v1270 = vsub.f32 %v1260, %v1269
        %v1271 = vmul.f32 %v1270, %v1270
        %v1272 = vsel %vm415, %v1271, 0.0
        %1273 = vadd.xlane.f32.xlu0 %v1272
        %v1274 = vpop.xlane.xlu0 %1273
        %v1275 = vmul.f32 %v1274, %v1268
        %v1276 = vadd.f32 %v1275, 1e-05
        %v1277 = vrsqrt.pop %v1276
        %v1278 = vmul.f32 %v1270, %v1277
        %v1280 = vlaneseq
        %v1281 = vshrl.u32 %v1280, 7
        %v1282 = vsub.s32 0, %v1281
        %v1283 = vrot.slane %v1263, %v1282
        %v1285 = vmul.f32 %v1278, %v1283
        %v1287 = vlaneseq
        %v1288 = vshrl.u32 %v1287, 7
        %v1289 = vsub.s32 0, %v1288
        %v1290 = vrot.slane %v1264, %v1289
        %v1292 = vadd.f32 %v1285, %v1290
        %v1293 = vld [vmem:[%s6] sm:$0xff]
        %v1294 = vld [vmem:[%s6 + $0x8] sm:$0xff]
        %v1295 = vld [vmem:[%s6 + $0x10] sm:$0xff]
        %v1296 = vld [vmem:[%s6 + $0x18] sm:$0xff]
        %v1298 = vsel %vm415, %v1292, 0
        %1300 = vmatprep.subr.mxu0 0.0
        %1301 = vmatpush1.msra.mxu0 %v1293
        %1302 = vmatprep.subr.mxu0 0.0
        %1303 = vmatpush1.msra.mxu0 %v1294
        %1304 = vmatprep.subr.mxu0 0.0
        %1305 = vmatpush1.msra.mxu0 %v1295
        %1306 = vmatprep.subr.mxu0 0.0
        %1307 = vmatpush1.msra.mxu0 %v1296
        %1308 = vmatprep.subr.mxu0 0.0
        %1309 = vmatpush1.msra.mxu0 0.0
        %1310 = vmatprep.subr.mxu0 0.0
        %1311 = vmatpush1.msra.mxu0 0.0
        %1312 = vmatprep.subr.mxu0 0.0
        %1313 = vmatpush1.msra.mxu0 0.0
        %1314 = vmatprep.subr.mxu0 0.0
        %1315 = vmatpush1.msra.mxu0 0.0
        %1316 = vmatprep.subr.mxu0 0.0
        %1317 = vmatpush1.msra.mxu0 0.0
        %1318 = vmatprep.subr.mxu0 0.0
        %1319 = vmatpush1.msra.mxu0 0.0
        %1320 = vmatprep.subr.mxu0 0.0
        %1321 = vmatpush1.msra.mxu0 0.0
        %1322 = vmatprep.subr.mxu0 0.0
        %1323 = vmatpush1.msra.mxu0 0.0
        %1324 = vmatprep.subr.mxu0 0.0
        %1325 = vmatpush1.msra.mxu0 0.0
        %1326 = vmatprep.subr.mxu0 0.0
        %1327 = vmatpush1.msra.mxu0 0.0
        %1328 = vmatprep.subr.mxu0 0.0
        %1329 = vmatpush1.msra.mxu0 0.0
        %1330 = vmatprep.subr.mxu0 0.0
        %1331 = vmatpush1.msra.mxu0 0.0
        %1332 = vmatprep.subr.mxu0 0.0
        %1333 = vmatpush1.msra.mxu0 0.0
        %1334 = vmatprep.subr.mxu0 0.0
        %1335 = vmatpush1.msra.mxu0 0.0
        %1336 = vmatprep.subr.mxu0 0.0
        %1337 = vmatpush1.msra.mxu0 0.0
        %1338 = vmatprep.subr.mxu0 0.0
        %1339 = vmatpush1.msra.mxu0 0.0
        %1340 = vmatprep.subr.mxu0 0.0
        %1341 = vmatpush1.msra.mxu0 0.0
        %1342 = vmatprep.subr.mxu0 0.0
        %1343 = vmatpush1.msra.mxu0 0.0
        %1344 = vmatprep.subr.mxu0 0.0
        %1345 = vmatpush1.msra.mxu0 0.0
        %1346 = vmatprep.subr.mxu0 0.0
        %1347 = vmatpush1.msra.mxu0 0.0
        %1348 = vmatprep.subr.mxu0 0.0
        %1349 = vmatpush1.msra.mxu0 0.0
        %1350 = vmatprep.subr.mxu0 0.0
        %1351 = vmatpush1.msra.mxu0 0.0
        %1352 = vmatprep.subr.mxu0 0.0
        %1353 = vmatpush1.msra.mxu0 0.0
        %1354 = vmatprep.subr.mxu0 0.0
        %1355 = vmatpush1.msra.mxu0 0.0
        %1356 = vmatprep.subr.mxu0 0.0
        %1357 = vmatpush1.msra.mxu0 0.0
        %1358 = vmatprep.subr.mxu0 0.0
        %1359 = vmatpush1.msra.mxu0 0.0
        %1360 = vmatprep.subr.mxu0 0.0
        %1361 = vmatpush1.msra.mxu0 0.0
        %1362 = vmatprep.subr.mxu0 0.0
        %1363 = vmatpush1.msra.mxu0 0.0
        %1364 = vmatprep.mubr.f32.mxu0 0.0
        %1365 = vmatmul.mubr.f32.gmra.mrb[0].mxu0 %v1298
        %v1366 = vpop.f32.mrb[0].mxu0
        %v1367 = vadd.f32 0.0, %v1366
        %v1368 = vpop.f32.mrb[0].mxu0
        %1369 = vdwg.mxu0
        %v1370 = vmax.f32 %v1367, 0.0
        %v1371 = vld [vmem:[%s7] sm:$0xff]
        %v1372 = vld [vmem:[%s7 + $0x8] sm:$0xff]
        %v1373 = vld [vmem:[%s7 + $0x10] sm:$0xff]
        %v1374 = vld [vmem:[%s7 + $0x18] sm:$0xff]
        %v1375 = vld [vmem:[%s7 + $0x20] sm:$0xff]
        %v1376 = vld [vmem:[%s7 + $0x28] sm:$0xff]
        %v1377 = vld [vmem:[%s7 + $0x30] sm:$0xff]
        %v1378 = vld [vmem:[%s7 + $0x38] sm:$0xff]
        %vm1379 = vcmask 523264
        %v1381 = vsel %vm1379, %v1370, 0
        %1383 = vmatprep.subr.mxu0 0.0
        %1384 = vmatpush1.msra.mxu0 %v1371
        %1385 = vmatprep.subr.mxu0 0.0
        %1386 = vmatpush1.msra.mxu0 %v1372
        %1387 = vmatprep.subr.mxu0 0.0
        %1388 = vmatpush1.msra.mxu0 %v1373
        %1389 = vmatprep.subr.mxu0 0.0
        %1390 = vmatpush1.msra.mxu0 %v1374
        %1391 = vmatprep.subr.mxu0 0.0
        %1392 = vmatpush1.msra.mxu0 %v1375
        %1393 = vmatprep.subr.mxu0 0.0
        %1394 = vmatpush1.msra.mxu0 %v1376
        %1395 = vmatprep.subr.mxu0 0.0
        %1396 = vmatpush1.msra.mxu0 %v1377
        %1397 = vmatprep.subr.mxu0 0.0
        %1398 = vmatpush1.msra.mxu0 %v1378
        %1399 = vmatprep.subr.mxu0 0.0
        %1400 = vmatpush1.msra.mxu0 0.0
        %1401 = vmatprep.subr.mxu0 0.0
        %1402 = vmatpush1.msra.mxu0 0.0
        %1403 = vmatprep.subr.mxu0 0.0
        %1404 = vmatpush1.msra.mxu0 0.0
        %1405 = vmatprep.subr.mxu0 0.0
        %1406 = vmatpush1.msra.mxu0 0.0
        %1407 = vmatprep.subr.mxu0 0.0
        %1408 = vmatpush1.msra.mxu0 0.0
        %1409 = vmatprep.subr.mxu0 0.0
        %1410 = vmatpush1.msra.mxu0 0.0
        %1411 = vmatprep.subr.mxu0 0.0
        %1412 = vmatpush1.msra.mxu0 0.0
        %1413 = vmatprep.subr.mxu0 0.0
        %1414 = vmatpush1.msra.mxu0 0.0
        %1415 = vmatprep.subr.mxu0 0.0
        %1416 = vmatpush1.msra.mxu0 0.0
        %1417 = vmatprep.subr.mxu0 0.0
        %1418 = vmatpush1.msra.mxu0 0.0
        %1419 = vmatprep.subr.mxu0 0.0
        %1420 = vmatpush1.msra.mxu0 0.0
        %1421 = vmatprep.subr.mxu0 0.0
        %1422 = vmatpush1.msra.mxu0 0.0
        %1423 = vmatprep.subr.mxu0 0.0
        %1424 = vmatpush1.msra.mxu0 0.0
        %1425 = vmatprep.subr.mxu0 0.0
        %1426 = vmatpush1.msra.mxu0 0.0
        %1427 = vmatprep.subr.mxu0 0.0
        %1428 = vmatpush1.msra.mxu0 0.0
        %1429 = vmatprep.subr.mxu0 0.0
        %1430 = vmatpush1.msra.mxu0 0.0
        %1431 = vmatprep.subr.mxu0 0.0
        %1432 = vmatpush1.msra.mxu0 0.0
        %1433 = vmatprep.subr.mxu0 0.0
        %1434 = vmatpush1.msra.mxu0 0.0
        %1435 = vmatprep.subr.mxu0 0.0
        %1436 = vmatpush1.msra.mxu0 0.0
        %1437 = vmatprep.subr.mxu0 0.0
        %1438 = vmatpush1.msra.mxu0 0.0
        %1439 = vmatprep.subr.mxu0 0.0
        %1440 = vmatpush1.msra.mxu0 0.0
        %1441 = vmatprep.subr.mxu0 0.0
        %1442 = vmatpush1.msra.mxu0 0.0
        %1443 = vmatprep.subr.mxu0 0.0
        %1444 = vmatpush1.msra.mxu0 0.0
        %1445 = vmatprep.subr.mxu0 0.0
        %1446 = vmatpush1.msra.mxu0 0.0
        %1447 = vmatprep.mubr.f32.mxu0 0.0
        %1448 = vmatmul.mubr.f32.gmra.mrb[0].mxu0 %v1381
        %v1449 = vpop.f32.mrb[0].mxu0
        %v1450 = vadd.f32 %v1292, %v1449
        %v1451 = vpop.f32.mrb[0].mxu0
        %1452 = vdwg.mxu0
        %v1453 = vld [vmem:[%s8] sm:$0x1]
        %v1454 = vld [vmem:[%s9] sm:$0x1]
        %v1455 = vsel %vm415, %v1450, 0.0
        %1456 = vadd.xlane.f32.xlu0 %v1455
        %v1457 = vpop.xlane.xlu0 %1456
        %v1458 = vmul.f32 %v1457, %v1268
        %v1459 = vsub.f32 %v1450, %v1458
        %v1460 = vmul.f32 %v1459, %v1459
        %v1461 = vsel %vm415, %v1460, 0.0
        %1462 = vadd.xlane.f32.xlu0 %v1461
        %v1463 = vpop.xlane.xlu0 %1462
        %v1464 = vmul.f32 %v1463, %v1268
        %v1465 = vadd.f32 %v1464, 1e-05
        %v1466 = vrsqrt.pop %v1465
        %v1467 = vmul.f32 %v1459, %v1466
        %v1469 = vlaneseq
        %v1470 = vshrl.u32 %v1469, 7
        %v1471 = vsub.s32 0, %v1470
        %v1472 = vrot.slane %v1453, %v1471
        %v1474 = vmul.f32 %v1467, %v1472
        %v1476 = vlaneseq
        %v1477 = vshrl.u32 %v1476, 7
        %v1478 = vsub.s32 0, %v1477
        %v1479 = vrot.slane %v1454, %v1478
        %v1481 = vadd.f32 %v1474, %v1479
        %1482 = vst.msk [vmem:[%s394] sm:$0xff] %vm415, %v1481
        %s1483 = sand.u32 %s257, 1
        %s1484 = scalar_lea.sflag [#allocation3], %s1483
        %s1485 = sand.u32 %s257, 1
        %s1486 = smul.addr %s1485, 8
        %s1487 = scalar_lea.vmem [#allocation2], %s1486
        %s1488 = sand.u32 %s283, 1
        %s1489 = scalar_lea.sflag [#allocation5], %s1488
        %s1490 = sand.u32 %s283, 1
        %s1491 = smul.addr %s1490, 32
        %s1492 = scalar_lea.vmem [#allocation4], %s1491
        // Predicated region
        $region61: #{encoder_layer.1} parent=59 // pred_check
          %p1493 = pneg %p267
        $region62: #{encoder_layer.1} parent=59 // pred_check_branch
          %1495 = sbr.rel (%p1493) target = $region64
        $region63: #{encoder_layer.1} parent=59 // pred_region
          %s1497 = ssub.s32 128, 128
          %1498 = vsyncadd %s1484, %s1497
          %s1499 = smul.addr %s29, 128
          %s1500 = scalar_lea.hbm %s10, %s1499
          %s1502 = sshll.u32 %s1487, 4
          %s1503 = int_to_ptr.vmem [resolvable:$true] %s1502
          %1505 = dma.vmem_to_hbm [thread:$0]  %s1503, 128, %s1500, %s1484
        $region64: #{encoder_layer.1} parent=59 // pred_fallthru
          _
        // Predicated region
        $region65: #{encoder_layer.1} parent=59 // pred_check
          %p1506 = pneg %p293
        $region66: #{encoder_layer.1} parent=59 // pred_check_branch
          %1508 = sbr.rel (%p1506) target = $region68
        $region67: #{encoder_layer.1} parent=59 // pred_region
          %s1510 = ssub.s32 512, 512
          %1511 = vsyncadd %s1489, %s1510
          %s1512 = smul.addr %s29, 4
          %s1513 = smul.addr %s1512, 128
          %s1514 = scalar_lea.hbm %s11, %s1513
          %s1515 = sshll.u32 %s1492, 4
          %s1516 = int_to_ptr.vmem [resolvable:$true] %s1515
          %1521 = dma.vmem_to_hbm [thread:$0]  %s1516, 512, %s1514, %s1489, 128, 128, 8
        $region68: #{encoder_layer.1} parent=59 // pred_fallthru
          _
      $region60: #{encoder_layer.1} parent=5 // pred_fallthru
        _
      %p1522 = scmp.le.s32.totalorder 2, %s24
      // Predicated region
      $region69: #{encoder_layer.1} parent=5 // pred_check
        %p1523 = pneg %p1522
      $region70: #{encoder_layer.1} parent=5 // pred_check_branch
        %1525 = sbr.rel (%p1523) target = $region72
      $region71: #{encoder_layer.1} parent=5 // pred_region
        %s1526 = ssub.s32 %s24, 2
        // Predicated region
        $region73: #{encoder_layer.1} parent=71 // pred_check
          %p1527 = pneg %p273
        $region74: #{encoder_layer.1} parent=71 // pred_check_branch
          %1529 = sbr.rel (%p1527) target = $region76
        $region75: #{encoder_layer.1} parent=71 // pred_region
          %s1530 = sand.u32 %s258, 1
          %s1531 = scalar_lea.sflag [#allocation3], %s1530
          %s1532 = sand.u32 %s258, 1
          %s1533 = smul.addr %s1532, 8
          %s1534 = scalar_lea.vmem [#allocation2], %s1533
          %1535 = dma.done %s1531, 128
        $region76: #{encoder_layer.1} parent=71 // pred_fallthru
          _
        // Predicated region
        $region77: #{encoder_layer.1} parent=71 // pred_check
          %p1536 = pneg %p299
        $region78: #{encoder_layer.1} parent=71 // pred_check_branch
          %1538 = sbr.rel (%p1536) target = $region80
        $region79: #{encoder_layer.1} parent=71 // pred_region
          %s1539 = sand.u32 %s284, 1
          %s1540 = scalar_lea.sflag [#allocation5], %s1539
          %s1541 = sand.u32 %s284, 1
          %s1542 = smul.addr %s1541, 32
          %s1543 = scalar_lea.vmem [#allocation4], %s1542
          %1544 = dma.done %s1540, 512
        $region80: #{encoder_layer.1} parent=71 // pred_fallthru
          _
      $region72: #{encoder_layer.1} parent=5 // pred_fallthru
        _
    $region6: #{encoder_layer.1} parent=1 // loop_footer
      %s28 = sadd.s32 1, %s24
    $region7: #{encoder_layer.1} parent=1 // loop_footer_branch
      %23 = sbr.rel target = $region3
    $region8: #{encoder_layer.1} parent=1 // loop_exit
      _
    %1545 = vsyncpa [#allocation3], 1
    %s1546 = scalar_lea.sflag [#allocation3], 1
    %1547 = vsyncpa %s1546, 1
    %1548 = vsyncpa [#allocation5], 1
    %s1549 = scalar_lea.sflag [#allocation5], 1
    %1550 = vsyncpa %s1549, 1

</llo_original>
